<compile_context>
chip_gen: v7x
topology: tpu7x:2x2x1
jax: 0.10.0
libtpu: 0.0.40
codegen_flags: <defaults>
</compile_context>

<pallas_src>
import jax
import jax.numpy as jnp
from jax.experimental import pallas as pl
from jax.experimental.pallas import tpu as pltpu


def _round_up(x, m):
    return ((x + m - 1) // m) * m


def _nbytes(a):
    return a.size * a.dtype.itemsize


def _make_double_q_kernel(mode, n_layers):
    """Kernel computing both Q MLPs on one (tb, *) batch tile held in VMEM."""

    def kernel(*refs):
        obs_ref, act_ref, w0o_ref, w0a_ref, b0_ref = refs[:5]
        layer_refs = refs[5:-1]
        out_ref = refs[-1]

        cdt = w0o_ref.dtype                       # MXU compute dtype (bf16)

        # Fused first layer for BOTH Q nets: (tb, 2*H0), f32 accumulation on MXU.
        # TODO(synk): optionally copy obs/act into one (tb, D) VMEM scratch and
        # issue a single layer-0 dot (halves MXU push/drain for shallow nets).
        h = (jnp.dot(obs_ref[...].astype(cdt), w0o_ref[...],
                     preferred_element_type=jnp.float32)
             + jnp.dot(act_ref[...].astype(cdt), w0a_ref[...],
                       preferred_element_type=jnp.float32)
             + b0_ref[...])

        if n_layers == 1:                         # hidden_depth == 0: linear only
            out_ref[...] = h.astype(out_ref.dtype)
            return

        h = jnp.maximum(h, 0.0)                   # ReLU in f32

        if mode == "fused":
            # Block-diagonal hidden + final weights: whole double-Q net stays one
            # (tb, 2*H) chain; final (2*H, 2) weight yields (tb, 2) directly.
            idx = 0
            for li in range(1, n_layers):
                w = layer_refs[idx][...]          # (2*in, 2*out) bf16 block-diag
                b = layer_refs[idx + 1][...]      # (1, 2*out)    f32
                idx += 2
                h = jnp.dot(h.astype(cdt), w,
                            preferred_element_type=jnp.float32) + b
                if li < n_layers - 1:
                    h = jnp.maximum(h, 0.0)
            out_ref[...] = h.astype(out_ref.dtype)
            return

        # "split": per-Q hidden width is a multiple of 128 -> the Q1/Q2 split is
        # lane-tile aligned (free), per-Q matmuls avoid block-diagonal 2x FLOPs.
        half = h.shape[-1] // 2
        h1, h2 = h[:, :half], h[:, half:]
        idx = 0
        for _ in range(1, n_layers - 1):          # hidden layers
            w1, b1 = layer_refs[idx][...], layer_refs[idx + 1][...]
            w2, b2 = layer_refs[idx + 2][...], layer_refs[idx + 3][...]
            idx += 4
            h1 = jnp.maximum(
                jnp.dot(h1.astype(cdt), w1,
                        preferred_element_type=jnp.float32) + b1, 0.0)
            h2 = jnp.maximum(
                jnp.dot(h2.astype(cdt), w2,
                        preferred_element_type=jnp.float32) + b2, 0.0)
        # Final layer: zero-padded (H, 2) weights per Q -> one (tb, 2) result;
        # no 1-lane dots and no concatenation of (tb, 1) arrays.
        w1p = layer_refs[idx][...]
        w2p = layer_refs[idx + 1][...]
        bf = layer_refs[idx + 2][...]
        out = (jnp.dot(h1.astype(cdt), w1p, preferred_element_type=jnp.float32)
               + jnp.dot(h2.astype(cdt), w2p, preferred_element_type=jnp.float32)
               + bf)
        out_ref[...] = out.astype(out_ref.dtype)

    return kernel


def _block_diag(w1, w2):
    i1, o1 = w1.shape
    i2, o2 = w2.shape
    top = jnp.concatenate([w1, jnp.zeros((i1, o2), w1.dtype)], axis=1)
    bot = jnp.concatenate([jnp.zeros((i2, o1), w2.dtype), w2], axis=1)
    return jnp.concatenate([top, bot], axis=0)


def prepare_double_q_params(q1_params, q2_params, obs_dim,
                            compute_dtype=jnp.bfloat16):
    """One-time packing of PyTorch-layout params for the Pallas kernel.

    q{1,2}_params: list of (weight (out, in), bias (out,)) pairs (Torch layout).
    Returns (mode, n_layers, w0_obs, w0_act, b0, layers) with
      w0_obs (obs_dim, 2*H0) bf16, w0_act (act_dim, 2*H0) bf16, b0 (1, 2*H0) f32.
    """
    n_layers = len(q1_params)
    assert len(q2_params) == n_layers

    def t32(a):
        return jnp.asarray(a, jnp.float32)

    w1_0, b1_0 = q1_params[0]
    w2_0, b2_0 = q2_params[0]
    w0 = jnp.concatenate([t32(w1_0).T, t32(w2_0).T], axis=1)      # (D, 2*H0)
    b0 = jnp.concatenate([t32(b1_0), t32(b2_0)])[None, :]         # (1, 2*H0)
    w0_obs = w0[:obs_dim].astype(compute_dtype)
    w0_act = w0[obs_dim:].astype(compute_dtype)

    if n_layers == 1:                                             # hidden_depth == 0
        return ("fused", n_layers, w0_obs, w0_act, b0, ())

    hidden = int(t32(w1_0).shape[0])
    # TODO(synk): for large hidden widths not multiple of 128, a zero-padded
    # "split" layout would beat the block-diagonal fallback used here.
    mode = "split" if hidden % 128 == 0 else "fused"

    layers = []
    if mode == "fused":
        for li in range(1, n_layers):
            w1, b1 = q1_params[li]
            w2, b2 = q2_params[li]
            layers.append(_block_diag(t32(w1).T, t32(w2).T).astype(compute_dtype))
            layers.append(jnp.concatenate([t32(b1), t32(b2)])[None, :])
    else:
        for li in range(1, n_layers - 1):
            w1, b1 = q1_params[li]
            w2, b2 = q2_params[li]
            layers += [t32(w1).T.astype(compute_dtype), t32(b1)[None, :],
                       t32(w2).T.astype(compute_dtype), t32(b2)[None, :]]
        w1, b1 = q1_params[-1]
        w2, b2 = q2_params[-1]
        h_last = int(t32(w1).shape[1])
        zeros = jnp.zeros((h_last, 1), jnp.float32)
        layers.append(jnp.concatenate([t32(w1).T, zeros], axis=1)
                      .astype(compute_dtype))                     # (H, 2): [w1 | 0]
        layers.append(jnp.concatenate([zeros, t32(w2).T], axis=1)
                      .astype(compute_dtype))                     # (H, 2): [0 | w2]
        layers.append(jnp.concatenate([t32(b1), t32(b2)])[None, :])   # (1, 2)

    return (mode, n_layers, w0_obs, w0_act, b0, tuple(layers))


def _vmem_capacity_bytes():
    try:
        return int(pltpu.get_tpu_info().vmem_capacity_bytes)
    except Exception:
        return 64 * 2 ** 20      # conservative default: v7x per-TensorCore VMEM


def double_q_critic_forward(obs, action, packed_params, *, block_b=512):
    """Pallas implementation of DoubleQCritic.forward -> (q1, q2), each (B,1) f32."""
    mode, n_layers, w0_obs, w0_act, b0, layers = packed_params

    assert obs.shape[0] == action.shape[0]
    B = obs.shape[0]
    obs = jnp.asarray(obs, jnp.float32)
    action = jnp.asarray(action, jnp.float32)
    obs_dim, act_dim = obs.shape[1], action.shape[1]

    # Grid: always >= 2 steps so "parallel" batch sharding engages both v7x
    # TensorCores; tb derived from the step count so batch padding is at most
    # 7 rows per tile (instead of up to a whole tile).
    n_steps = max(2, pl.cdiv(B, block_b))
    tb = _round_up(pl.cdiv(B, n_steps), 8)
    padded_B = tb * n_steps
    if padded_B != B:
        pad = padded_B - B
        obs = jnp.pad(obs, ((0, pad), (0, 0)))
        action = jnp.pad(action, ((0, pad), (0, 0)))

    weight_args = (w0_obs, w0_act, b0) + tuple(layers)
    kernel = _make_double_q_kernel(mode, n_layers)

    # VMEM budget: weights (x2 buffers as an upper bound), double-buffered
    # activation I/O tiles, live f32 intermediates, +25% headroom; capped at
    # ~85% of this generation's physical per-core VMEM (v7x ~54 MiB of 64,
    # v5e/v6e ~109 MiB of 128).
    cap_limit = int(0.85 * _vmem_capacity_bytes())
    weight_bytes = 2 * sum(_nbytes(a) for a in weight_args)
    io_bytes = 2 * 4 * tb * (obs_dim + act_dim + 2)
    act_bytes = 3 * 4 * tb * max(int(b0.shape[1]), 128)
    est = int(1.25 * (weight_bytes + io_bytes + act_bytes))
    vmem_limit = int(min(cap_limit, max(est, 32 * 2 ** 20)))

    def run(single_buffer_weights):
        def const_spec(a):
            nd = a.ndim
            idx_map = lambda i, _nd=nd: (0,) * _nd
            if single_buffer_weights:
                # Constant index_map -> double buffering is pure VMEM waste.
                return pl.BlockSpec(a.shape, idx_map,
                                    pipeline_mode=pl.Buffered(1))
            return pl.BlockSpec(a.shape, idx_map)

        in_specs = ([pl.BlockSpec((tb, obs_dim), lambda i: (i, 0)),
                     pl.BlockSpec((tb, act_dim), lambda i: (i, 0))]
                    + [const_spec(a) for a in weight_args])
        out_specs = pl.BlockSpec((tb, 2), lambda i: (i, 0))

        return pl.pallas_call(
            kernel,
            out_shape=jax.ShapeDtypeStruct((padded_B, 2), jnp.float32),
            grid_spec=pltpu.PrefetchScalarGridSpec(
                num_scalar_prefetch=0,
                grid=(n_steps,),
                in_specs=in_specs,
                out_specs=out_specs),
            compiler_params=pltpu.CompilerParams(
                dimension_semantics=("parallel",),    # megacore sharding on v7x
                vmem_limit_bytes=vmem_limit),
        )(obs, action, *weight_args)

    try:
        out = run(single_buffer_weights=True)
    except Exception:
        # Installed Pallas may not support pipeline_mode=pl.Buffered(1);
        # fall back to default (double-buffered) weight specs.
        out = run(single_buffer_weights=False)

    return out[:B, 0:1], out[:B, 1:2]


def init_mlp_params(key, input_dim, hidden_dim, output_dim, hidden_depth):
    """Deterministic init matching utils.mlp shapes + utils.weight_init
    (orthogonal weights, zero bias)."""
    ortho = jax.nn.initializers.orthogonal()
    params = []
    if hidden_depth == 0:
        dims = [(output_dim, input_dim)]
    else:
        dims = [(hidden_dim, input_dim)]
        dims += [(hidden_dim, hidden_dim)] * (hidden_depth - 1)
        dims += [(output_dim, hidden_dim)]
    for (out_d, in_d) in dims:
        key, wk = jax.random.split(key)
        w = ortho(wk, (out_d, in_d), jnp.float32)
        b = jnp.zeros((out_d,), jnp.float32)
        params.append((w, b))
    return key, params


def _reference_forward(obs, action, q1_params, q2_params, compute_dtype=None):
    """Pure-JAX reference. With compute_dtype=bf16 it mirrors the kernel's
    precision policy (bf16 matmul operands, f32 accumulate / epilogue)."""
    x = jnp.concatenate([obs, action], axis=-1).astype(jnp.float32)

    def mlp(x, params):
        h = x
        for i, (w, b) in enumerate(params):
            wt = jnp.asarray(w, jnp.float32).T
            if compute_dtype is not None:
                h = jnp.dot(h.astype(compute_dtype), wt.astype(compute_dtype),
                            preferred_element_type=jnp.float32)
            else:
                h = jnp.dot(h, wt, preferred_element_type=jnp.float32)
            h = h + jnp.asarray(b, jnp.float32)
            if i < len(params) - 1:
                h = jnp.maximum(h, 0.0)
        return h

    return mlp(x, q1_params), mlp(x, q2_params)


def _run_case(key, B, obs_dim, action_dim, hidden_dim, hidden_depth):
    key, k_obs, k_act = jax.random.split(key, 3)
    obs = jax.random.normal(k_obs, (B, obs_dim), jnp.float32)
    action = jax.random.normal(k_act, (B, action_dim), jnp.float32)

    key, q1_params = init_mlp_params(key, obs_dim + action_dim, hidden_dim, 1,
                                     hidden_depth)
    key, q2_params = init_mlp_params(key, obs_dim + action_dim, hidden_dim, 1,
                                     hidden_depth)

    packed = prepare_double_q_params(q1_params, q2_params, obs_dim)
    q1, q2 = double_q_critic_forward(obs, action, packed)
    jax.block_until_ready((q1, q2))
    assert q1.shape == (B, 1) and q2.shape == (B, 1)

    # Precision-matched reference (bf16 matmul operands, f32 accumulation).
    q1_ref, q2_ref = _reference_forward(obs, action, q1_params, q2_params,
                                        compute_dtype=jnp.bfloat16)
    assert jnp.allclose(q1, q1_ref, atol=1e-4, rtol=1e-4)
    assert jnp.allclose(q2, q2_ref, atol=1e-4, rtol=1e-4)

    # Loose sanity check vs full-f32 reference (bf16 rounding only).
    q1_f32, q2_f32 = _reference_forward(obs, action, q1_params, q2_params)
    assert jnp.allclose(q1, q1_f32, atol=2e-1, rtol=2e-1)
    assert jnp.allclose(q2, q2_f32, atol=2e-1, rtol=2e-1)
    return key


if __name__ == "__main__":
    key = jax.random.PRNGKey(0)
    # Small-hidden config (block-diagonal "fused" layout).
    key = _run_case(key, B=2, obs_dim=16, action_dim=8,
                    hidden_dim=32, hidden_depth=2)
    # 128-aligned hidden config ("split" layout) with an awkward batch size.
    key = _run_case(key, B=6, obs_dim=17, action_dim=6,
                    hidden_dim=128, hidden_depth=2)
    # hidden_depth == 0: pure linear head.
    key = _run_case(key, B=3, obs_dim=10, action_dim=5,
                    hidden_dim=32, hidden_depth=0)
    print("KERNEL_OK")
</pallas_src>

<mosaic_0001>
module attributes {stable_mosaic.version = 11 : i64} {
  func.func @kernel(%arg0: i32, %arg1: memref<8x16xf32, #tpu.memory_space<vmem>>, %arg2: memref<8x8xf32, #tpu.memory_space<vmem>>, %arg3: memref<16x64xbf16, #tpu.memory_space<vmem>>, %arg4: memref<8x64xbf16, #tpu.memory_space<vmem>>, %arg5: memref<1x64xf32, #tpu.memory_space<vmem>>, %arg6: memref<64x64xbf16, #tpu.memory_space<vmem>>, %arg7: memref<1x64xf32, #tpu.memory_space<vmem>>, %arg8: memref<64x2xbf16, #tpu.memory_space<vmem>>, %arg9: memref<1x2xf32, #tpu.memory_space<vmem>>, %arg10: memref<8x2xf32, #tpu.memory_space<vmem>>) attributes {dimension_semantics = [#tpu.dimension_semantics<parallel>], iteration_bounds = array<i64: 2>, scalar_prefetch = 0 : i64, scratch_operands = 0 : i64, tpu.core_type = #tpu.core_type<tc>, window_params = [{transform_indices = @transform_0, window_bounds = array<i64: 8, 16>}, {transform_indices = @transform_1, window_bounds = array<i64: 8, 8>}, {pipeline_mode = #tpu.pipeline_mode<synchronous>, transform_indices = @transform_2, window_bounds = array<i64: 16, 64>}, {pipeline_mode = #tpu.pipeline_mode<synchronous>, transform_indices = @transform_3, window_bounds = array<i64: 8, 64>}, {pipeline_mode = #tpu.pipeline_mode<synchronous>, transform_indices = @transform_4, window_bounds = array<i64: 1, 64>}, {pipeline_mode = #tpu.pipeline_mode<synchronous>, transform_indices = @transform_5, window_bounds = array<i64: 64, 64>}, {pipeline_mode = #tpu.pipeline_mode<synchronous>, transform_indices = @transform_6, window_bounds = array<i64: 1, 64>}, {pipeline_mode = #tpu.pipeline_mode<synchronous>, transform_indices = @transform_7, window_bounds = array<i64: 64, 2>}, {pipeline_mode = #tpu.pipeline_mode<synchronous>, transform_indices = @transform_8, window_bounds = array<i64: 1, 2>}, {transform_indices = @transform_9, window_bounds = array<i64: 8, 2>}]} {
    %c0 = arith.constant 0 : index
    %c0_0 = arith.constant 0 : index
    %0 = vector.load %arg1[%c0, %c0_0] : memref<8x16xf32, #tpu.memory_space<vmem>>, vector<8x16xf32>
    %1 = arith.truncf %0 : vector<8x16xf32> to vector<8x16xbf16>
    %c0_1 = arith.constant 0 : index
    %c0_2 = arith.constant 0 : index
    %2 = vector.load %arg3[%c0_1, %c0_2] : memref<16x64xbf16, #tpu.memory_space<vmem>>, vector<16x64xbf16>
    %cst = arith.constant dense<0.000000e+00> : vector<8x64xf32>
    %3 = tpu.matmul %1, %2, %cst {dimension_numbers = #tpu.dot_dimension_numbers<[1], [0], [0], [1], [0, 0, 1, 1], [], []>} : vector<8x16xbf16>, vector<16x64xbf16>, vector<8x64xf32> -> vector<8x64xf32>
    %c0_3 = arith.constant 0 : index
    %c0_4 = arith.constant 0 : index
    %4 = vector.load %arg2[%c0_3, %c0_4] : memref<8x8xf32, #tpu.memory_space<vmem>>, vector<8x8xf32>
    %5 = arith.truncf %4 : vector<8x8xf32> to vector<8x8xbf16>
    %c0_5 = arith.constant 0 : index
    %c0_6 = arith.constant 0 : index
    %6 = vector.load %arg4[%c0_5, %c0_6] : memref<8x64xbf16, #tpu.memory_space<vmem>>, vector<8x64xbf16>
    %cst_7 = arith.constant dense<0.000000e+00> : vector<8x64xf32>
    %7 = tpu.matmul %5, %6, %cst_7 {dimension_numbers = #tpu.dot_dimension_numbers<[1], [0], [0], [1], [0, 0, 1, 1], [], []>} : vector<8x8xbf16>, vector<8x64xbf16>, vector<8x64xf32> -> vector<8x64xf32>
    %8 = arith.addf %3, %7 : vector<8x64xf32>
    %c0_8 = arith.constant 0 : index
    %c0_9 = arith.constant 0 : index
    %9 = vector.load %arg5[%c0_8, %c0_9] : memref<1x64xf32, #tpu.memory_space<vmem>>, vector<1x64xf32>
    %10 = vector.broadcast %9 : vector<1x64xf32> to vector<8x64xf32>
    %11 = arith.addf %8, %10 : vector<8x64xf32>
    %cst_10 = arith.constant 0.000000e+00 : f32
    %12 = vector.broadcast %cst_10 : f32 to vector<8x64xf32>
    %13 = arith.maximumf %11, %12 : vector<8x64xf32>
    %c0_11 = arith.constant 0 : index
    %c0_12 = arith.constant 0 : index
    %14 = vector.load %arg6[%c0_11, %c0_12] : memref<64x64xbf16, #tpu.memory_space<vmem>>, vector<64x64xbf16>
    %c0_13 = arith.constant 0 : index
    %c0_14 = arith.constant 0 : index
    %15 = vector.load %arg7[%c0_13, %c0_14] : memref<1x64xf32, #tpu.memory_space<vmem>>, vector<1x64xf32>
    %16 = arith.truncf %13 : vector<8x64xf32> to vector<8x64xbf16>
    %cst_15 = arith.constant dense<0.000000e+00> : vector<8x64xf32>
    %17 = tpu.matmul %16, %14, %cst_15 {dimension_numbers = #tpu.dot_dimension_numbers<[1], [0], [0], [1], [0, 0, 1, 1], [], []>} : vector<8x64xbf16>, vector<64x64xbf16>, vector<8x64xf32> -> vector<8x64xf32>
    %18 = vector.broadcast %15 : vector<1x64xf32> to vector<8x64xf32>
    %19 = arith.addf %17, %18 : vector<8x64xf32>
    %cst_16 = arith.constant 0.000000e+00 : f32
    %20 = vector.broadcast %cst_16 : f32 to vector<8x64xf32>
    %21 = arith.maximumf %19, %20 : vector<8x64xf32>
    %c0_17 = arith.constant 0 : index
    %c0_18 = arith.constant 0 : index
    %22 = vector.load %arg8[%c0_17, %c0_18] : memref<64x2xbf16, #tpu.memory_space<vmem>>, vector<64x2xbf16>
    %c0_19 = arith.constant 0 : index
    %c0_20 = arith.constant 0 : index
    %23 = vector.load %arg9[%c0_19, %c0_20] : memref<1x2xf32, #tpu.memory_space<vmem>>, vector<1x2xf32>
    %24 = arith.truncf %21 : vector<8x64xf32> to vector<8x64xbf16>
    %cst_21 = arith.constant dense<0.000000e+00> : vector<8x2xf32>
    %25 = tpu.matmul %24, %22, %cst_21 {dimension_numbers = #tpu.dot_dimension_numbers<[1], [0], [0], [1], [0, 0, 1, 1], [], []>} : vector<8x64xbf16>, vector<64x2xbf16>, vector<8x2xf32> -> vector<8x2xf32>
    %26 = vector.broadcast %23 : vector<1x2xf32> to vector<8x2xf32>
    %27 = arith.addf %25, %26 : vector<8x2xf32>
    %c0_22 = arith.constant 0 : index
    %c0_23 = arith.constant 0 : index
    %28 = vector.load %arg10[%c0_22, %c0_23] : memref<8x2xf32, #tpu.memory_space<vmem>>, vector<8x2xf32>
    tpu.vector_store %arg10[%c0_22, %c0_23], %27 {strides = array<i32>} : memref<8x2xf32, #tpu.memory_space<vmem>>, vector<8x2xf32>,
    return
  }
  func.func @transform_0(%arg0: i32) -> (i32, i32) {
    %c0_i32 = arith.constant 0 : i32
    %c0_i32_0 = arith.constant 0 : i32
    return %arg0, %c0_i32 : i32, i32
  }
  func.func @transform_1(%arg0: i32) -> (i32, i32) {
    %c0_i32 = arith.constant 0 : i32
    %c0_i32_0 = arith.constant 0 : i32
    return %arg0, %c0_i32 : i32, i32
  }
  func.func @transform_2(%arg0: i32) -> (i32, i32) {
    %c0_i32 = arith.constant 0 : i32
    %c0_i32_0 = arith.constant 0 : i32
    %c0_i32_1 = arith.constant 0 : i32
    return %c0_i32, %c0_i32_0 : i32, i32
  }
  func.func @transform_3(%arg0: i32) -> (i32, i32) {
    %c0_i32 = arith.constant 0 : i32
    %c0_i32_0 = arith.constant 0 : i32
    %c0_i32_1 = arith.constant 0 : i32
    return %c0_i32, %c0_i32_0 : i32, i32
  }
  func.func @transform_4(%arg0: i32) -> (i32, i32) {
    %c0_i32 = arith.constant 0 : i32
    %c0_i32_0 = arith.constant 0 : i32
    %c0_i32_1 = arith.constant 0 : i32
    return %c0_i32, %c0_i32_0 : i32, i32
  }
  func.func @transform_5(%arg0: i32) -> (i32, i32) {
    %c0_i32 = arith.constant 0 : i32
    %c0_i32_0 = arith.constant 0 : i32
    %c0_i32_1 = arith.constant 0 : i32
    return %c0_i32, %c0_i32_0 : i32, i32
  }
  func.func @transform_6(%arg0: i32) -> (i32, i32) {
    %c0_i32 = arith.constant 0 : i32
    %c0_i32_0 = arith.constant 0 : i32
    %c0_i32_1 = arith.constant 0 : i32
    return %c0_i32, %c0_i32_0 : i32, i32
  }
  func.func @transform_7(%arg0: i32) -> (i32, i32) {
    %c0_i32 = arith.constant 0 : i32
    %c0_i32_0 = arith.constant 0 : i32
    %c0_i32_1 = arith.constant 0 : i32
    return %c0_i32, %c0_i32_0 : i32, i32
  }
  func.func @transform_8(%arg0: i32) -> (i32, i32) {
    %c0_i32 = arith.constant 0 : i32
    %c0_i32_0 = arith.constant 0 : i32
    %c0_i32_1 = arith.constant 0 : i32
    return %c0_i32, %c0_i32_0 : i32, i32
  }
  func.func @transform_9(%arg0: i32) -> (i32, i32) {
    %c0_i32 = arith.constant 0 : i32
    %c0_i32_0 = arith.constant 0 : i32
    return %arg0, %c0_i32 : i32, i32
  }
}

module attributes {stable_mosaic.version = 11 : i64} {
  func.func @kernel(%arg0: i32, %arg1: memref<8x16xf32, #tpu.memory_space<vmem>>, %arg2: memref<8x8xf32, #tpu.memory_space<vmem>>, %arg3: memref<16x64xbf16, #tpu.memory_space<vmem>>, %arg4: memref<8x64xbf16, #tpu.memory_space<vmem>>, %arg5: memref<1x64xf32, #tpu.memory_space<vmem>>, %arg6: memref<64x64xbf16, #tpu.memory_space<vmem>>, %arg7: memref<1x64xf32, #tpu.memory_space<vmem>>, %arg8: memref<64x2xbf16, #tpu.memory_space<vmem>>, %arg9: memref<1x2xf32, #tpu.memory_space<vmem>>, %arg10: memref<8x2xf32, #tpu.memory_space<vmem>>) attributes {dimension_semantics = [#tpu.dimension_semantics<parallel>], iteration_bounds = array<i64: 2>, scalar_prefetch = 0 : i64, scratch_operands = 0 : i64, tpu.core_type = #tpu.core_type<tc>, window_params = [{transform_indices = @transform_0, window_bounds = array<i64: 8, 16>}, {transform_indices = @transform_1, window_bounds = array<i64: 8, 8>}, {pipeline_mode = #tpu.pipeline_mode<synchronous>, transform_indices = @transform_2, window_bounds = array<i64: 16, 64>}, {pipeline_mode = #tpu.pipeline_mode<synchronous>, transform_indices = @transform_3, window_bounds = array<i64: 8, 64>}, {pipeline_mode = #tpu.pipeline_mode<synchronous>, transform_indices = @transform_4, window_bounds = array<i64: 1, 64>}, {pipeline_mode = #tpu.pipeline_mode<synchronous>, transform_indices = @transform_5, window_bounds = array<i64: 64, 64>}, {pipeline_mode = #tpu.pipeline_mode<synchronous>, transform_indices = @transform_6, window_bounds = array<i64: 1, 64>}, {pipeline_mode = #tpu.pipeline_mode<synchronous>, transform_indices = @transform_7, window_bounds = array<i64: 64, 2>}, {pipeline_mode = #tpu.pipeline_mode<synchronous>, transform_indices = @transform_8, window_bounds = array<i64: 1, 2>}, {transform_indices = @transform_9, window_bounds = array<i64: 8, 2>}]} {
    %c0 = arith.constant 0 : index
    %c0_0 = arith.constant 0 : index
    %0 = vector.load %arg1[%c0, %c0_0] : memref<8x16xf32, #tpu.memory_space<vmem>>, vector<8x16xf32>
    %1 = arith.truncf %0 : vector<8x16xf32> to vector<8x16xbf16>
    %c0_1 = arith.constant 0 : index
    %c0_2 = arith.constant 0 : index
    %2 = vector.load %arg3[%c0_1, %c0_2] : memref<16x64xbf16, #tpu.memory_space<vmem>>, vector<16x64xbf16>
    %cst = arith.constant dense<0.000000e+00> : vector<8x64xf32>
    %3 = tpu.matmul %1, %2, %cst {dimension_numbers = #tpu.dot_dimension_numbers<[1], [0], [0], [1], [0, 0, 1, 1], [], []>} : vector<8x16xbf16>, vector<16x64xbf16>, vector<8x64xf32> -> vector<8x64xf32>
    %c0_3 = arith.constant 0 : index
    %c0_4 = arith.constant 0 : index
    %4 = vector.load %arg2[%c0_3, %c0_4] : memref<8x8xf32, #tpu.memory_space<vmem>>, vector<8x8xf32>
    %5 = arith.truncf %4 : vector<8x8xf32> to vector<8x8xbf16>
    %c0_5 = arith.constant 0 : index
    %c0_6 = arith.constant 0 : index
    %6 = vector.load %arg4[%c0_5, %c0_6] : memref<8x64xbf16, #tpu.memory_space<vmem>>, vector<8x64xbf16>
    %cst_7 = arith.constant dense<0.000000e+00> : vector<8x64xf32>
    %7 = tpu.matmul %5, %6, %cst_7 {dimension_numbers = #tpu.dot_dimension_numbers<[1], [0], [0], [1], [0, 0, 1, 1], [], []>} : vector<8x8xbf16>, vector<8x64xbf16>, vector<8x64xf32> -> vector<8x64xf32>
    %8 = arith.addf %3, %7 : vector<8x64xf32>
    %c0_8 = arith.constant 0 : index
    %c0_9 = arith.constant 0 : index
    %9 = vector.load %arg5[%c0_8, %c0_9] : memref<1x64xf32, #tpu.memory_space<vmem>>, vector<1x64xf32>
    %10 = vector.broadcast %9 : vector<1x64xf32> to vector<8x64xf32>
    %11 = arith.addf %8, %10 : vector<8x64xf32>
    %cst_10 = arith.constant 0.000000e+00 : f32
    %12 = vector.broadcast %cst_10 : f32 to vector<8x64xf32>
    %13 = arith.maximumf %11, %12 : vector<8x64xf32>
    %c0_11 = arith.constant 0 : index
    %c0_12 = arith.constant 0 : index
    %14 = vector.load %arg6[%c0_11, %c0_12] : memref<64x64xbf16, #tpu.memory_space<vmem>>, vector<64x64xbf16>
    %c0_13 = arith.constant 0 : index
    %c0_14 = arith.constant 0 : index
    %15 = vector.load %arg7[%c0_13, %c0_14] : memref<1x64xf32, #tpu.memory_space<vmem>>, vector<1x64xf32>
    %16 = arith.truncf %13 : vector<8x64xf32> to vector<8x64xbf16>
    %cst_15 = arith.constant dense<0.000000e+00> : vector<8x64xf32>
    %17 = tpu.matmul %16, %14, %cst_15 {dimension_numbers = #tpu.dot_dimension_numbers<[1], [0], [0], [1], [0, 0, 1, 1], [], []>} : vector<8x64xbf16>, vector<64x64xbf16>, vector<8x64xf32> -> vector<8x64xf32>
    %18 = vector.broadcast %15 : vector<1x64xf32> to vector<8x64xf32>
    %19 = arith.addf %17, %18 : vector<8x64xf32>
    %cst_16 = arith.constant 0.000000e+00 : f32
    %20 = vector.broadcast %cst_16 : f32 to vector<8x64xf32>
    %21 = arith.maximumf %19, %20 : vector<8x64xf32>
    %c0_17 = arith.constant 0 : index
    %c0_18 = arith.constant 0 : index
    %22 = vector.load %arg8[%c0_17, %c0_18] : memref<64x2xbf16, #tpu.memory_space<vmem>>, vector<64x2xbf16>
    %c0_19 = arith.constant 0 : index
    %c0_20 = arith.constant 0 : index
    %23 = vector.load %arg9[%c0_19, %c0_20] : memref<1x2xf32, #tpu.memory_space<vmem>>, vector<1x2xf32>
    %24 = arith.truncf %21 : vector<8x64xf32> to vector<8x64xbf16>
    %cst_21 = arith.constant dense<0.000000e+00> : vector<8x2xf32>
    %25 = tpu.matmul %24, %22, %cst_21 {dimension_numbers = #tpu.dot_dimension_numbers<[1], [0], [0], [1], [0, 0, 1, 1], [], []>} : vector<8x64xbf16>, vector<64x2xbf16>, vector<8x2xf32> -> vector<8x2xf32>
    %26 = vector.broadcast %23 : vector<1x2xf32> to vector<8x2xf32>
    %27 = arith.addf %25, %26 : vector<8x2xf32>
    %c0_22 = arith.constant 0 : index
    %c0_23 = arith.constant 0 : index
    %28 = vector.load %arg10[%c0_22, %c0_23] : memref<8x2xf32, #tpu.memory_space<vmem>>, vector<8x2xf32>
    tpu.vector_store %arg10[%c0_22, %c0_23], %27 {strides = array<i32>} : memref<8x2xf32, #tpu.memory_space<vmem>>, vector<8x2xf32>,
    return
  }
  func.func @transform_0(%arg0: i32) -> (i32, i32) {
    %c0_i32 = arith.constant 0 : i32
    %c0_i32_0 = arith.constant 0 : i32
    return %arg0, %c0_i32 : i32, i32
  }
  func.func @transform_1(%arg0: i32) -> (i32, i32) {
    %c0_i32 = arith.constant 0 : i32
    %c0_i32_0 = arith.constant 0 : i32
    return %arg0, %c0_i32 : i32, i32
  }
  func.func @transform_2(%arg0: i32) -> (i32, i32) {
    %c0_i32 = arith.constant 0 : i32
    %c0_i32_0 = arith.constant 0 : i32
    %c0_i32_1 = arith.constant 0 : i32
    return %c0_i32, %c0_i32_0 : i32, i32
  }
  func.func @transform_3(%arg0: i32) -> (i32, i32) {
    %c0_i32 = arith.constant 0 : i32
    %c0_i32_0 = arith.constant 0 : i32
    %c0_i32_1 = arith.constant 0 : i32
    return %c0_i32, %c0_i32_0 : i32, i32
  }
  func.func @transform_4(%arg0: i32) -> (i32, i32) {
    %c0_i32 = arith.constant 0 : i32
    %c0_i32_0 = arith.constant 0 : i32
    %c0_i32_1 = arith.constant 0 : i32
    return %c0_i32, %c0_i32_0 : i32, i32
  }
  func.func @transform_5(%arg0: i32) -> (i32, i32) {
    %c0_i32 = arith.constant 0 : i32
    %c0_i32_0 = arith.constant 0 : i32
    %c0_i32_1 = arith.constant 0 : i32
    return %c0_i32, %c0_i32_0 : i32, i32
  }
  func.func @transform_6(%arg0: i32) -> (i32, i32) {
    %c0_i32 = arith.constant 0 : i32
    %c0_i32_0 = arith.constant 0 : i32
    %c0_i32_1 = arith.constant 0 : i32
    return %c0_i32, %c0_i32_0 : i32, i32
  }
  func.func @transform_7(%arg0: i32) -> (i32, i32) {
    %c0_i32 = arith.constant 0 : i32
    %c0_i32_0 = arith.constant 0 : i32
    %c0_i32_1 = arith.constant 0 : i32
    return %c0_i32, %c0_i32_0 : i32, i32
  }
  func.func @transform_8(%arg0: i32) -> (i32, i32) {
    %c0_i32 = arith.constant 0 : i32
    %c0_i32_0 = arith.constant 0 : i32
    %c0_i32_1 = arith.constant 0 : i32
    return %c0_i32, %c0_i32_0 : i32, i32
  }
  func.func @transform_9(%arg0: i32) -> (i32, i32) {
    %c0_i32 = arith.constant 0 : i32
    %c0_i32_0 = arith.constant 0 : i32
    return %arg0, %c0_i32 : i32, i32
  }
}

</mosaic_0001>

<llo_original>
// kernel: tpu_custom_call.1
$region0: #{tpu_custom_call.1}
  #allocation0 [shape = 'u32[]', space=smem, size = 0x4, offset = 0x4, fixed_abs, tag = 'smem constant byte address 0x4 - core index']
  #allocation1 [shape = 'u32[144,128]{1,0:T(1,128)}', space=vmem, size = 0x12000, scoped, tag = 'internal scratch']
  %s0 = inlined_call_operand.vmem [shape: f32[16,16], index: 0, kind: input, shape index: {}]
  %s1 = inlined_call_operand.vmem [shape: f32[16,8], index: 1, kind: input, shape index: {}]
  %s2 = inlined_call_operand.vmem [shape: bf16[16,64], index: 2, kind: input, shape index: {}]
  %s3 = inlined_call_operand.vmem [shape: bf16[8,64], index: 3, kind: input, shape index: {}]
  %s4 = inlined_call_operand.vmem [shape: f32[1,64], index: 4, kind: input, shape index: {}]
  %s5 = inlined_call_operand.vmem [shape: bf16[64,64], index: 5, kind: input, shape index: {}]
  %s6 = inlined_call_operand.vmem [shape: f32[1,64], index: 6, kind: input, shape index: {}]
  %s7 = inlined_call_operand.vmem [shape: bf16[64,2], index: 7, kind: input, shape index: {}]
  %s8 = inlined_call_operand.vmem [shape: f32[1,2], index: 8, kind: input, shape index: {}]
  %s9 = inlined_call_operand.vmem [shape: f32[16,2], index: 9, kind: output, shape index: {}]
  %s10 = sld [smem:[#allocation0]]
  $region69: #{tpu_custom_call.1} parent=0
    _
  %s12 = ssub.s32 1, %s10
  %s13 = scalar_select 0, %s12, %s10
  loop: start=0, step=1, limit=4
  $region2: #{tpu_custom_call.1} parent=0 // loop_pre_header
    _
  $region3: #{tpu_custom_call.1} parent=0 // loop_header
    %s15 = sphi 0, %s19
    %p16 = scmp.ge.s32.totalorder %s15, 4
    %s25 = sphi 0, %s27
    %s28 = sphi 0, %s25
    %s29 = sphi 0, %s28
    %s45 = sphi 0, %s29
    %s51 = sphi 0, %s53
    %s54 = sphi 0, %s51
    %s55 = sphi 0, %s54
    %s71 = sphi 0, %s55
    %s75 = sphi 0, %s75
    %s77 = sphi 0, %s75
    %s78 = sphi 0, %s77
    %s92 = sphi 0, %s78
    %s96 = sphi 0, %s96
    %s98 = sphi 0, %s96
    %s99 = sphi 0, %s98
    %s113 = sphi 0, %s99
    %s117 = sphi 0, %s117
    %s119 = sphi 0, %s117
    %s120 = sphi 0, %s119
    %s134 = sphi 0, %s120
    %s138 = sphi 0, %s138
    %s140 = sphi 0, %s138
    %s141 = sphi 0, %s140
    %s155 = sphi 0, %s141
    %s159 = sphi 0, %s159
    %s161 = sphi 0, %s159
    %s162 = sphi 0, %s161
    %s176 = sphi 0, %s162
    %s180 = sphi 0, %s180
    %s182 = sphi 0, %s180
    %s183 = sphi 0, %s182
    %s197 = sphi 0, %s183
    %s201 = sphi 0, %s201
    %s203 = sphi 0, %s201
    %s204 = sphi 0, %s203
    %s218 = sphi 0, %s204
    %s224 = sphi 0, %s226
    %s227 = sphi 0, %s224
    %s228 = sphi 0, %s227
    %s244 = sphi 0, %s228
  $region4: #{tpu_custom_call.1} parent=0 // loop_header_branch
    %18 = sbr.rel (%p16) target = $region8
  $region5: #{tpu_custom_call.1} parent=0 // loop_body
    %s20 = ssub.s32 %s15, 1
    %s21 = ssub.s32 %s15, 2
    %s22 = sadd.s32 %s15, 1
    %s23 = ssub.s32 %s15, %s22
    %p24 = scmp.eq.s32.totalorder %s23, 0
    %s26 = sadd.s32 %s25, 1
    %s27 = scalar_select %p24, %s25, %s26
    %p30 = pneg %p24
    %p31 = scmp.eq.s32.totalorder %s15, 1
    %p32 = por %p30, %p31
    %p33 = scmp.ne.s32.totalorder %s25, %s28
    %p34 = scmp.eq.s32.totalorder %s15, 0
    %p35 = por %p33, %p34
    %p36 = scmp.ne.s32.totalorder %s25, %s28
    %p37 = scmp.eq.s32.totalorder %s20, 1
    %p38 = por %p36, %p37
    %p39 = scmp.ne.s32.totalorder %s28, %s29
    %p40 = scmp.eq.s32.totalorder %s20, 0
    %p41 = por %p39, %p40
    %p42 = scmp.ne.s32.totalorder %s28, %s29
    %p43 = scmp.eq.s32.totalorder %s21, 1
    %p44 = por %p42, %p43
    %p46 = scmp.ne.s32.totalorder %s29, %s45
    %p47 = scmp.eq.s32.totalorder %s21, 0
    %p48 = por %p46, %p47
    %s49 = ssub.s32 %s15, %s22
    %p50 = scmp.eq.s32.totalorder %s49, 0
    %s52 = sadd.s32 %s51, 1
    %s53 = scalar_select %p50, %s51, %s52
    %p56 = pneg %p50
    %p57 = scmp.eq.s32.totalorder %s15, 1
    %p58 = por %p56, %p57
    %p59 = scmp.ne.s32.totalorder %s51, %s54
    %p60 = scmp.eq.s32.totalorder %s15, 0
    %p61 = por %p59, %p60
    %p62 = scmp.ne.s32.totalorder %s51, %s54
    %p63 = scmp.eq.s32.totalorder %s20, 1
    %p64 = por %p62, %p63
    %p65 = scmp.ne.s32.totalorder %s54, %s55
    %p66 = scmp.eq.s32.totalorder %s20, 0
    %p67 = por %p65, %p66
    %p68 = scmp.ne.s32.totalorder %s54, %s55
    %p69 = scmp.eq.s32.totalorder %s21, 1
    %p70 = por %p68, %p69
    %p72 = scmp.ne.s32.totalorder %s55, %s71
    %p73 = scmp.eq.s32.totalorder %s21, 0
    %p74 = por %p72, %p73
    %s76 = sadd.s32 %s75, 1
    %p79 = scmp.eq.s32.totalorder %s15, 1
    %p80 = scmp.ne.s32.totalorder %s75, %s77
    %p81 = scmp.eq.s32.totalorder %s15, 0
    %p82 = por %p80, %p81
    %p83 = scmp.ne.s32.totalorder %s75, %s77
    %p84 = scmp.eq.s32.totalorder %s20, 1
    %p85 = por %p83, %p84
    %p86 = scmp.ne.s32.totalorder %s77, %s78
    %p87 = scmp.eq.s32.totalorder %s20, 0
    %p88 = por %p86, %p87
    %p89 = scmp.ne.s32.totalorder %s77, %s78
    %p90 = scmp.eq.s32.totalorder %s21, 1
    %p91 = por %p89, %p90
    %p93 = scmp.ne.s32.totalorder %s78, %s92
    %p94 = scmp.eq.s32.totalorder %s21, 0
    %p95 = por %p93, %p94
    %s97 = sadd.s32 %s96, 1
    %p100 = scmp.eq.s32.totalorder %s15, 1
    %p101 = scmp.ne.s32.totalorder %s96, %s98
    %p102 = scmp.eq.s32.totalorder %s15, 0
    %p103 = por %p101, %p102
    %p104 = scmp.ne.s32.totalorder %s96, %s98
    %p105 = scmp.eq.s32.totalorder %s20, 1
    %p106 = por %p104, %p105
    %p107 = scmp.ne.s32.totalorder %s98, %s99
    %p108 = scmp.eq.s32.totalorder %s20, 0
    %p109 = por %p107, %p108
    %p110 = scmp.ne.s32.totalorder %s98, %s99
    %p111 = scmp.eq.s32.totalorder %s21, 1
    %p112 = por %p110, %p111
    %p114 = scmp.ne.s32.totalorder %s99, %s113
    %p115 = scmp.eq.s32.totalorder %s21, 0
    %p116 = por %p114, %p115
    %s118 = sadd.s32 %s117, 1
    %p121 = scmp.eq.s32.totalorder %s15, 1
    %p122 = scmp.ne.s32.totalorder %s117, %s119
    %p123 = scmp.eq.s32.totalorder %s15, 0
    %p124 = por %p122, %p123
    %p125 = scmp.ne.s32.totalorder %s117, %s119
    %p126 = scmp.eq.s32.totalorder %s20, 1
    %p127 = por %p125, %p126
    %p128 = scmp.ne.s32.totalorder %s119, %s120
    %p129 = scmp.eq.s32.totalorder %s20, 0
    %p130 = por %p128, %p129
    %p131 = scmp.ne.s32.totalorder %s119, %s120
    %p132 = scmp.eq.s32.totalorder %s21, 1
    %p133 = por %p131, %p132
    %p135 = scmp.ne.s32.totalorder %s120, %s134
    %p136 = scmp.eq.s32.totalorder %s21, 0
    %p137 = por %p135, %p136
    %s139 = sadd.s32 %s138, 1
    %p142 = scmp.eq.s32.totalorder %s15, 1
    %p143 = scmp.ne.s32.totalorder %s138, %s140
    %p144 = scmp.eq.s32.totalorder %s15, 0
    %p145 = por %p143, %p144
    %p146 = scmp.ne.s32.totalorder %s138, %s140
    %p147 = scmp.eq.s32.totalorder %s20, 1
    %p148 = por %p146, %p147
    %p149 = scmp.ne.s32.totalorder %s140, %s141
    %p150 = scmp.eq.s32.totalorder %s20, 0
    %p151 = por %p149, %p150
    %p152 = scmp.ne.s32.totalorder %s140, %s141
    %p153 = scmp.eq.s32.totalorder %s21, 1
    %p154 = por %p152, %p153
    %p156 = scmp.ne.s32.totalorder %s141, %s155
    %p157 = scmp.eq.s32.totalorder %s21, 0
    %p158 = por %p156, %p157
    %s160 = sadd.s32 %s159, 1
    %p163 = scmp.eq.s32.totalorder %s15, 1
    %p164 = scmp.ne.s32.totalorder %s159, %s161
    %p165 = scmp.eq.s32.totalorder %s15, 0
    %p166 = por %p164, %p165
    %p167 = scmp.ne.s32.totalorder %s159, %s161
    %p168 = scmp.eq.s32.totalorder %s20, 1
    %p169 = por %p167, %p168
    %p170 = scmp.ne.s32.totalorder %s161, %s162
    %p171 = scmp.eq.s32.totalorder %s20, 0
    %p172 = por %p170, %p171
    %p173 = scmp.ne.s32.totalorder %s161, %s162
    %p174 = scmp.eq.s32.totalorder %s21, 1
    %p175 = por %p173, %p174
    %p177 = scmp.ne.s32.totalorder %s162, %s176
    %p178 = scmp.eq.s32.totalorder %s21, 0
    %p179 = por %p177, %p178
    %s181 = sadd.s32 %s180, 1
    %p184 = scmp.eq.s32.totalorder %s15, 1
    %p185 = scmp.ne.s32.totalorder %s180, %s182
    %p186 = scmp.eq.s32.totalorder %s15, 0
    %p187 = por %p185, %p186
    %p188 = scmp.ne.s32.totalorder %s180, %s182
    %p189 = scmp.eq.s32.totalorder %s20, 1
    %p190 = por %p188, %p189
    %p191 = scmp.ne.s32.totalorder %s182, %s183
    %p192 = scmp.eq.s32.totalorder %s20, 0
    %p193 = por %p191, %p192
    %p194 = scmp.ne.s32.totalorder %s182, %s183
    %p195 = scmp.eq.s32.totalorder %s21, 1
    %p196 = por %p194, %p195
    %p198 = scmp.ne.s32.totalorder %s183, %s197
    %p199 = scmp.eq.s32.totalorder %s21, 0
    %p200 = por %p198, %p199
    %s202 = sadd.s32 %s201, 1
    %p205 = scmp.eq.s32.totalorder %s15, 1
    %p206 = scmp.ne.s32.totalorder %s201, %s203
    %p207 = scmp.eq.s32.totalorder %s15, 0
    %p208 = por %p206, %p207
    %p209 = scmp.ne.s32.totalorder %s201, %s203
    %p210 = scmp.eq.s32.totalorder %s20, 1
    %p211 = por %p209, %p210
    %p212 = scmp.ne.s32.totalorder %s203, %s204
    %p213 = scmp.eq.s32.totalorder %s20, 0
    %p214 = por %p212, %p213
    %p215 = scmp.ne.s32.totalorder %s203, %s204
    %p216 = scmp.eq.s32.totalorder %s21, 1
    %p217 = por %p215, %p216
    %p219 = scmp.ne.s32.totalorder %s204, %s218
    %p220 = scmp.eq.s32.totalorder %s21, 0
    %p221 = por %p219, %p220
    %s222 = ssub.s32 %s15, %s22
    %p223 = scmp.eq.s32.totalorder %s222, 0
    %s225 = sadd.s32 %s224, 1
    %s226 = scalar_select %p223, %s224, %s225
    %p229 = pneg %p223
    %p230 = scmp.eq.s32.totalorder %s15, 1
    %p231 = por %p229, %p230
    %p232 = scmp.ne.s32.totalorder %s224, %s227
    %p233 = scmp.eq.s32.totalorder %s15, 0
    %p234 = por %p232, %p233
    %p235 = scmp.ne.s32.totalorder %s224, %s227
    %p236 = scmp.eq.s32.totalorder %s20, 1
    %p237 = por %p235, %p236
    %p238 = scmp.ne.s32.totalorder %s227, %s228
    %p239 = scmp.eq.s32.totalorder %s20, 0
    %p240 = por %p238, %p239
    %p241 = scmp.ne.s32.totalorder %s227, %s228
    %p242 = scmp.eq.s32.totalorder %s21, 1
    %p243 = por %p241, %p242
    %p245 = scmp.ne.s32.totalorder %s228, %s244
    %p246 = scmp.eq.s32.totalorder %s21, 0
    %p247 = por %p245, %p246
    %p248 = scmp.le.s32.totalorder 1, %s15
    %p249 = scmp.lt.s32.totalorder %s15, 3
    %p250 = pnand %p248, %p249
    %p251 = pneg %p250
    // Predicated region
    $region9: #{tpu_custom_call.1} parent=5 // pred_check
      _
    $region10: #{tpu_custom_call.1} parent=5 // pred_check_branch
      %253 = sbr.rel (%p250) target = $region12
    $region11: #{tpu_custom_call.1} parent=5 // pred_region
      %s254 = ssub.s32 %s15, 1
      // Predicated region
      $region13: #{tpu_custom_call.1} parent=11 // pred_check
        %p255 = pneg %p88
      $region14: #{tpu_custom_call.1} parent=11 // pred_check_branch
        %257 = sbr.rel (%p255) target = $region16
      $region15: #{tpu_custom_call.1} parent=11 // pred_region
        _
      $region16: #{tpu_custom_call.1} parent=11 // pred_fallthru
        _
      // Predicated region
      $region17: #{tpu_custom_call.1} parent=11 // pred_check
        %p258 = pneg %p109
      $region18: #{tpu_custom_call.1} parent=11 // pred_check_branch
        %260 = sbr.rel (%p258) target = $region20
      $region19: #{tpu_custom_call.1} parent=11 // pred_region
        _
      $region20: #{tpu_custom_call.1} parent=11 // pred_fallthru
        _
      // Predicated region
      $region21: #{tpu_custom_call.1} parent=11 // pred_check
        %p261 = pneg %p130
      $region22: #{tpu_custom_call.1} parent=11 // pred_check_branch
        %263 = sbr.rel (%p261) target = $region24
      $region23: #{tpu_custom_call.1} parent=11 // pred_region
        _
      $region24: #{tpu_custom_call.1} parent=11 // pred_fallthru
        _
      // Predicated region
      $region25: #{tpu_custom_call.1} parent=11 // pred_check
        %p264 = pneg %p151
      $region26: #{tpu_custom_call.1} parent=11 // pred_check_branch
        %266 = sbr.rel (%p264) target = $region28
      $region27: #{tpu_custom_call.1} parent=11 // pred_region
        _
      $region28: #{tpu_custom_call.1} parent=11 // pred_fallthru
        _
      // Predicated region
      $region29: #{tpu_custom_call.1} parent=11 // pred_check
        %p267 = pneg %p172
      $region30: #{tpu_custom_call.1} parent=11 // pred_check_branch
        %269 = sbr.rel (%p267) target = $region32
      $region31: #{tpu_custom_call.1} parent=11 // pred_region
        _
      $region32: #{tpu_custom_call.1} parent=11 // pred_fallthru
        _
      // Predicated region
      $region33: #{tpu_custom_call.1} parent=11 // pred_check
        %p270 = pneg %p193
      $region34: #{tpu_custom_call.1} parent=11 // pred_check_branch
        %272 = sbr.rel (%p270) target = $region36
      $region35: #{tpu_custom_call.1} parent=11 // pred_region
        _
      $region36: #{tpu_custom_call.1} parent=11 // pred_fallthru
        _
      // Predicated region
      $region37: #{tpu_custom_call.1} parent=11 // pred_check
        %p273 = pneg %p214
      $region38: #{tpu_custom_call.1} parent=11 // pred_check_branch
        %275 = sbr.rel (%p273) target = $region40
      $region39: #{tpu_custom_call.1} parent=11 // pred_region
        _
      $region40: #{tpu_custom_call.1} parent=11 // pred_fallthru
        _
    $region12: #{tpu_custom_call.1} parent=5 // pred_fallthru
      _
    %p276 = scmp.lt.s32.totalorder %s15, 2
    // Predicated region
    $region41: #{tpu_custom_call.1} parent=5 // pred_check
      %p277 = pneg %p276
    $region42: #{tpu_custom_call.1} parent=5 // pred_check_branch
      %279 = sbr.rel (%p277) target = $region44
    $region43: #{tpu_custom_call.1} parent=5 // pred_region
      // Predicated region
      $region45: #{tpu_custom_call.1} parent=43 // pred_check
        %p280 = pneg %p35
      $region46: #{tpu_custom_call.1} parent=43 // pred_check_branch
        %282 = sbr.rel (%p280) target = $region48
      $region47: #{tpu_custom_call.1} parent=43 // pred_region
        %p283 = scmp.lt.s32.totalorder %s15, 1
        %s284 = scalar_select %p283, %s15, 1
        %s285 = smul.addr %s284, 8
        %s286 = scalar_lea.vmem %s0, %s285
      $region48: #{tpu_custom_call.1} parent=43 // pred_fallthru
        _
      // Predicated region
      $region49: #{tpu_custom_call.1} parent=43 // pred_check
        %p287 = pneg %p61
      $region50: #{tpu_custom_call.1} parent=43 // pred_check_branch
        %289 = sbr.rel (%p287) target = $region52
      $region51: #{tpu_custom_call.1} parent=43 // pred_region
        %p290 = scmp.lt.s32.totalorder %s15, 1
        %s291 = scalar_select %p290, %s15, 1
        %s292 = smul.addr %s291, 8
        %s293 = scalar_lea.vmem %s1, %s292
      $region52: #{tpu_custom_call.1} parent=43 // pred_fallthru
        _
    $region44: #{tpu_custom_call.1} parent=5 // pred_fallthru
      _
    %p294 = scmp.le.s32.totalorder 1, %s15
    %p295 = scmp.lt.s32.totalorder %s15, 3
    %p296 = pnand %p294, %p295
    %p297 = pneg %p296
    // Predicated region
    $region53: #{tpu_custom_call.1} parent=5 // pred_check
      _
    $region54: #{tpu_custom_call.1} parent=5 // pred_check_branch
      %299 = sbr.rel (%p296) target = $region56
    $region55: #{tpu_custom_call.1} parent=5 // pred_region
      %s300 = ssub.s32 %s15, 1
      %p301 = scmp.lt.s32.totalorder %s20, 1
      %s302 = scalar_select %p301, %s20, 1
      %s303 = smul.addr %s302, 8
      %s304 = scalar_lea.vmem %s0, %s303
      %p305 = pneg %p41
      %p306 = pneg %p38
      %p307 = scmp.lt.s32.totalorder %s20, 1
      %s308 = scalar_select %p307, %s20, 1
      %s309 = smul.addr %s308, 8
      %s310 = scalar_lea.vmem %s1, %s309
      %p311 = pneg %p67
      %p312 = pneg %p64
      %p313 = pneg %p88
      %p314 = pneg %p85
      %p315 = pneg %p109
      %p316 = pneg %p106
      %p317 = pneg %p130
      %p318 = pneg %p127
      %p319 = pneg %p151
      %p320 = pneg %p148
      %p321 = pneg %p172
      %p322 = pneg %p169
      %p323 = pneg %p193
      %p324 = pneg %p190
      %p325 = pneg %p214
      %p326 = pneg %p211
      %p327 = pneg %p240
      %p328 = pneg %p237
      %p329 = scmp.lt.s32.totalorder %s20, 1
      %s330 = scalar_select %p329, %s20, 1
      %s331 = smul.addr %s330, 8
      %s332 = scalar_lea.vmem %s9, %s331
      %p333 = scmp.lt.s32.totalorder %s20, 1
      %s334 = scalar_select %p333, %s20, 1
      %s335 = smul.addr %s334, 8
      %s336 = scalar_lea.vmem %s0, %s335
      %p337 = scmp.lt.s32.totalorder %s20, 1
      %s338 = scalar_select %p337, %s20, 1
      %s339 = smul.addr %s338, 8
      %s340 = scalar_lea.vmem %s1, %s339
      %p341 = scmp.lt.s32.totalorder %s20, 1
      %s342 = scalar_select %p341, %s20, 1
      %s343 = smul.addr %s342, 8
      %s344 = scalar_lea.vmem %s9, %s343
      %v346 = vld [vmem:[%s336] sm:$0xff]
      %v347 = vpack.c.bf16 %v346, %v346
      %v348 = vld [vmem:[%s2] sm:$0xf]
      %v349 = vld [vmem:[%s2 + $0x4] sm:$0xf]
      %v350 = vld [vmem:[%s340] sm:$0xff]
      %v351 = vpack.c.bf16 %v350, %v350
      %v352 = vld [vmem:[%s3] sm:$0xf]
      %vm353 = vcmask 64512
      %v355 = vsel %vm353, %v351, 0
      %vm357 = vcmask 1043456
      %v359 = vsel %vm357, %v352, 0
      %361 = vmatprep.subr.bf16.mxu0 0
      %362 = vmatpush1.bf16.msra.mxu0 %v359
      %363 = vmatprep.subr.bf16.mxu0 0
      %364 = vmatpush1.bf16.msra.mxu0 0
      %365 = vmatprep.subr.bf16.mxu0 0
      %366 = vmatpush1.bf16.msra.mxu0 0
      %367 = vmatprep.subr.bf16.mxu0 0
      %368 = vmatpush1.bf16.msra.mxu0 0
      %369 = vmatprep.subr.bf16.mxu0 0
      %370 = vmatpush1.bf16.msra.mxu0 0
      %371 = vmatprep.subr.bf16.mxu0 0
      %372 = vmatpush1.bf16.msra.mxu0 0
      %373 = vmatprep.subr.bf16.mxu0 0
      %374 = vmatpush1.bf16.msra.mxu0 0
      %375 = vmatprep.subr.bf16.mxu0 0
      %376 = vmatpush1.bf16.msra.mxu0 0
      %377 = vmatprep.subr.bf16.mxu0 0
      %378 = vmatpush1.bf16.msra.mxu0 0
      %379 = vmatprep.subr.bf16.mxu0 0
      %380 = vmatpush1.bf16.msra.mxu0 0
      %381 = vmatprep.subr.bf16.mxu0 0
      %382 = vmatpush1.bf16.msra.mxu0 0
      %383 = vmatprep.subr.bf16.mxu0 0
      %384 = vmatpush1.bf16.msra.mxu0 0
      %385 = vmatprep.subr.bf16.mxu0 0
      %386 = vmatpush1.bf16.msra.mxu0 0
      %387 = vmatprep.subr.bf16.mxu0 0
      %388 = vmatpush1.bf16.msra.mxu0 0
      %389 = vmatprep.subr.bf16.mxu0 0
      %390 = vmatpush1.bf16.msra.mxu0 0
      %391 = vmatprep.subr.bf16.mxu0 0
      %392 = vmatpush1.bf16.msra.mxu0 0
      %393 = vmatprep.mubr.bf16.mxu0 0
      %394 = vmatmul.mubr.bf16.gmra.mrb[0].mxu0 %v355
      %v395 = vpop.f32.mrb[0].mxu0
      %v396 = vadd.f32 0.0, %v395
      %v397 = vpop.f32.mrb[0].mxu0
      %v398 = vpop.f32.mrb[0].mxu0
      %v399 = vpop.f32.mrb[0].mxu0
      %400 = vdwg.mxu0
      %v403 = vunpack.c.l.b16 %v348
      %v404 = vunpack.c.l.b16 %v349
      %v405 = vpack.c.b16 %v404, %v403
      %vm407 = vcmask 130048
      %v409 = vsel %vm407, %v347, 0
      %411 = vmatprep.subr.bf16.mxu0 0
      %412 = vmatpush1.bf16.msra.mxu0 %v405
      %413 = vmatprep.subr.bf16.mxu0 0
      %414 = vmatpush1.bf16.msra.mxu0 0
      %415 = vmatprep.subr.bf16.mxu0 0
      %416 = vmatpush1.bf16.msra.mxu0 0
      %417 = vmatprep.subr.bf16.mxu0 0
      %418 = vmatpush1.bf16.msra.mxu0 0
      %419 = vmatprep.subr.bf16.mxu0 0
      %420 = vmatpush1.bf16.msra.mxu0 0
      %421 = vmatprep.subr.bf16.mxu0 0
      %422 = vmatpush1.bf16.msra.mxu0 0
      %423 = vmatprep.subr.bf16.mxu0 0
      %424 = vmatpush1.bf16.msra.mxu0 0
      %425 = vmatprep.subr.bf16.mxu0 0
      %426 = vmatpush1.bf16.msra.mxu0 0
      %427 = vmatprep.subr.bf16.mxu0 0
      %428 = vmatpush1.bf16.msra.mxu0 0
      %429 = vmatprep.subr.bf16.mxu0 0
      %430 = vmatpush1.bf16.msra.mxu0 0
      %431 = vmatprep.subr.bf16.mxu0 0
      %432 = vmatpush1.bf16.msra.mxu0 0
      %433 = vmatprep.subr.bf16.mxu0 0
      %434 = vmatpush1.bf16.msra.mxu0 0
      %435 = vmatprep.subr.bf16.mxu0 0
      %436 = vmatpush1.bf16.msra.mxu0 0
      %437 = vmatprep.subr.bf16.mxu0 0
      %438 = vmatpush1.bf16.msra.mxu0 0
      %439 = vmatprep.subr.bf16.mxu0 0
      %440 = vmatpush1.bf16.msra.mxu0 0
      %441 = vmatprep.subr.bf16.mxu0 0
      %442 = vmatpush1.bf16.msra.mxu0 0
      %443 = vmatprep.mubr.bf16.mxu0 0
      %444 = vmatmul.mubr.bf16.gmra.mrb[0].mxu0 %v409
      %v445 = vpop.f32.mrb[0].mxu0
      %v446 = vadd.f32 %v396, %v445
      %v447 = vpop.f32.mrb[0].mxu0
      %v448 = vpop.f32.mrb[0].mxu0
      %v449 = vpop.f32.mrb[0].mxu0
      %450 = vdwg.mxu0
      %v451 = vld [vmem:[%s4] sm:$0x1]
      %v453 = vlaneseq
      %v454 = vshrl.u32 %v453, 7
      %v455 = vsub.s32 0, %v454
      %v456 = vrot.slane %v451, %v455
      %v458 = vadd.f32 %v446, %v456
      %v459 = vmax.f32 %v458, 0.0
      %v460 = vld [vmem:[%s5] sm:$0xf]
      %v461 = vld [vmem:[%s5 + $0x4] sm:$0xf]
      %v462 = vld [vmem:[%s5 + $0x8] sm:$0xf]
      %v463 = vld [vmem:[%s5 + $0xc] sm:$0xf]
      %v464 = vld [vmem:[%s5 + $0x10] sm:$0xf]
      %v465 = vld [vmem:[%s5 + $0x14] sm:$0xf]
      %v466 = vld [vmem:[%s5 + $0x18] sm:$0xf]
      %v467 = vld [vmem:[%s5 + $0x1c] sm:$0xf]
      %v468 = vld [vmem:[%s6] sm:$0x1]
      %v469 = vpack.c.bf16 %v459, %v459
      %v471 = vlaneseq
      %v472 = vshrl.u32 %v471, 7
      %v473 = vsub.s32 0, %v472
      %v474 = vrot.slane %v468, %v473
      %v484 = vunpack.c.l.b16 %v460
      %v485 = vunpack.c.l.b16 %v461
      %v486 = vunpack.c.l.b16 %v462
      %v487 = vunpack.c.l.b16 %v463
      %v488 = vunpack.c.l.b16 %v464
      %v489 = vunpack.c.l.b16 %v465
      %v490 = vunpack.c.l.b16 %v466
      %v491 = vunpack.c.l.b16 %v467
      %v492 = vpack.c.b16 %v485, %v484
      %v493 = vpack.c.b16 %v487, %v486
      %v494 = vpack.c.b16 %v489, %v488
      %v495 = vpack.c.b16 %v491, %v490
      %vm500 = vcmask 523264
      %v502 = vsel %vm500, %v469, 0
      %504 = vmatprep.subr.bf16.mxu0 0
      %505 = vmatpush1.bf16.msra.mxu0 %v492
      %506 = vmatprep.subr.bf16.mxu0 0
      %507 = vmatpush1.bf16.msra.mxu0 %v493
      %508 = vmatprep.subr.bf16.mxu0 0
      %509 = vmatpush1.bf16.msra.mxu0 %v494
      %510 = vmatprep.subr.bf16.mxu0 0
      %511 = vmatpush1.bf16.msra.mxu0 %v495
      %512 = vmatprep.subr.bf16.mxu0 0
      %513 = vmatpush1.bf16.msra.mxu0 0
      %514 = vmatprep.subr.bf16.mxu0 0
      %515 = vmatpush1.bf16.msra.mxu0 0
      %516 = vmatprep.subr.bf16.mxu0 0
      %517 = vmatpush1.bf16.msra.mxu0 0
      %518 = vmatprep.subr.bf16.mxu0 0
      %519 = vmatpush1.bf16.msra.mxu0 0
      %520 = vmatprep.subr.bf16.mxu0 0
      %521 = vmatpush1.bf16.msra.mxu0 0
      %522 = vmatprep.subr.bf16.mxu0 0
      %523 = vmatpush1.bf16.msra.mxu0 0
      %524 = vmatprep.subr.bf16.mxu0 0
      %525 = vmatpush1.bf16.msra.mxu0 0
      %526 = vmatprep.subr.bf16.mxu0 0
      %527 = vmatpush1.bf16.msra.mxu0 0
      %528 = vmatprep.subr.bf16.mxu0 0
      %529 = vmatpush1.bf16.msra.mxu0 0
      %530 = vmatprep.subr.bf16.mxu0 0
      %531 = vmatpush1.bf16.msra.mxu0 0
      %532 = vmatprep.subr.bf16.mxu0 0
      %533 = vmatpush1.bf16.msra.mxu0 0
      %534 = vmatprep.subr.bf16.mxu0 0
      %535 = vmatpush1.bf16.msra.mxu0 0
      %536 = vmatprep.mubr.bf16.mxu0 0
      %537 = vmatmul.mubr.bf16.gmra.mrb[0].mxu0 %v502
      %v538 = vpop.f32.mrb[0].mxu0
      %v539 = vadd.f32 %v474, %v538
      %v540 = vpop.f32.mrb[0].mxu0
      %v541 = vpop.f32.mrb[0].mxu0
      %v542 = vpop.f32.mrb[0].mxu0
      %543 = vdwg.mxu0
      %v544 = vmax.f32 %v539, 0.0
      %v545 = vld [vmem:[%s7] sm:$0xf]
      %v546 = vld [vmem:[%s7 + $0x4] sm:$0xf]
      %v547 = vld [vmem:[%s7 + $0x8] sm:$0xf]
      %v548 = vld [vmem:[%s7 + $0xc] sm:$0xf]
      %v549 = vld [vmem:[%s7 + $0x10] sm:$0xf]
      %v550 = vld [vmem:[%s7 + $0x14] sm:$0xf]
      %v551 = vld [vmem:[%s7 + $0x18] sm:$0xf]
      %v552 = vld [vmem:[%s7 + $0x1c] sm:$0xf]
      %v553 = vld [vmem:[%s8] sm:$0x1]
      %v554 = vpack.c.bf16 %v544, %v544
      %v556 = vlaneseq
      %v557 = vshrl.u32 %v556, 7
      %v558 = vsub.s32 0, %v557
      %v559 = vrot.slane %v553, %v558
      %v569 = vunpack.c.l.b16 %v545
      %v570 = vunpack.c.l.b16 %v546
      %v571 = vunpack.c.l.b16 %v547
      %v572 = vunpack.c.l.b16 %v548
      %v573 = vunpack.c.l.b16 %v549
      %v574 = vunpack.c.l.b16 %v550
      %v575 = vunpack.c.l.b16 %v551
      %v576 = vunpack.c.l.b16 %v552
      %v577 = vpack.c.b16 %v570, %v569
      %v578 = vpack.c.b16 %v572, %v571
      %v579 = vpack.c.b16 %v574, %v573
      %v580 = vpack.c.b16 %v576, %v575
      %v586 = vsel %vm500, %v554, 0
      %588 = vmatprep.subr.bf16.mxu0 0
      %589 = vmatpush1.bf16.msra.mxu0 %v577
      %590 = vmatprep.subr.bf16.mxu0 0
      %591 = vmatpush1.bf16.msra.mxu0 %v578
      %592 = vmatprep.subr.bf16.mxu0 0
      %593 = vmatpush1.bf16.msra.mxu0 %v579
      %594 = vmatprep.subr.bf16.mxu0 0
      %595 = vmatpush1.bf16.msra.mxu0 %v580
      %596 = vmatprep.subr.bf16.mxu0 0
      %597 = vmatpush1.bf16.msra.mxu0 0
      %598 = vmatprep.subr.bf16.mxu0 0
      %599 = vmatpush1.bf16.msra.mxu0 0
      %600 = vmatprep.subr.bf16.mxu0 0
      %601 = vmatpush1.bf16.msra.mxu0 0
      %602 = vmatprep.subr.bf16.mxu0 0
      %603 = vmatpush1.bf16.msra.mxu0 0
      %604 = vmatprep.subr.bf16.mxu0 0
      %605 = vmatpush1.bf16.msra.mxu0 0
      %606 = vmatprep.subr.bf16.mxu0 0
      %607 = vmatpush1.bf16.msra.mxu0 0
      %608 = vmatprep.subr.bf16.mxu0 0
      %609 = vmatpush1.bf16.msra.mxu0 0
      %610 = vmatprep.subr.bf16.mxu0 0
      %611 = vmatpush1.bf16.msra.mxu0 0
      %612 = vmatprep.subr.bf16.mxu0 0
      %613 = vmatpush1.bf16.msra.mxu0 0
      %614 = vmatprep.subr.bf16.mxu0 0
      %615 = vmatpush1.bf16.msra.mxu0 0
      %616 = vmatprep.subr.bf16.mxu0 0
      %617 = vmatpush1.bf16.msra.mxu0 0
      %618 = vmatprep.subr.bf16.mxu0 0
      %619 = vmatpush1.bf16.msra.mxu0 0
      %620 = vmatprep.mubr.bf16.mxu0 0
      %621 = vmatmul.mubr.bf16.gmra.mrb[0].mxu0 %v586
      %v622 = vpop.f32.mrb[0].mxu0
      %v623 = vadd.f32 %v559, %v622
      %v624 = vpop.f32.mrb[0].mxu0
      %v625 = vpop.f32.mrb[0].mxu0
      %v626 = vpop.f32.mrb[0].mxu0
      %627 = vdwg.mxu0
      %vm628 = vcmask 15360
      %629 = vst.msk [vmem:[%s344] sm:$0xff] %vm628, %v623
      %p630 = scmp.lt.s32.totalorder %s20, 1
      %s631 = scalar_select %p630, %s20, 1
      %s632 = smul.addr %s631, 8
      %s633 = scalar_lea.vmem %s9, %s632
      // Predicated region
      $region57: #{tpu_custom_call.1} parent=55 // pred_check
        %p634 = pneg %p237
      $region58: #{tpu_custom_call.1} parent=55 // pred_check_branch
        %636 = sbr.rel (%p634) target = $region60
      $region59: #{tpu_custom_call.1} parent=55 // pred_region
        _
      $region60: #{tpu_custom_call.1} parent=55 // pred_fallthru
        _
    $region56: #{tpu_custom_call.1} parent=5 // pred_fallthru
      _
    %p637 = scmp.le.s32.totalorder 2, %s15
    // Predicated region
    $region61: #{tpu_custom_call.1} parent=5 // pred_check
      %p638 = pneg %p637
    $region62: #{tpu_custom_call.1} parent=5 // pred_check_branch
      %640 = sbr.rel (%p638) target = $region64
    $region63: #{tpu_custom_call.1} parent=5 // pred_region
      %s641 = ssub.s32 %s15, 2
      // Predicated region
      $region65: #{tpu_custom_call.1} parent=63 // pred_check
        %p642 = pneg %p243
      $region66: #{tpu_custom_call.1} parent=63 // pred_check_branch
        %644 = sbr.rel (%p642) target = $region68
      $region67: #{tpu_custom_call.1} parent=63 // pred_region
        %p645 = scmp.lt.s32.totalorder %s21, 1
        %s646 = scalar_select %p645, %s21, 1
        %s647 = smul.addr %s646, 8
        %s648 = scalar_lea.vmem %s9, %s647
      $region68: #{tpu_custom_call.1} parent=63 // pred_fallthru
        _
    $region64: #{tpu_custom_call.1} parent=5 // pred_fallthru
      _
  $region6: #{tpu_custom_call.1} parent=0 // loop_footer
    %s19 = sadd.s32 1, %s15
  $region7: #{tpu_custom_call.1} parent=0 // loop_footer_branch
    %14 = sbr.rel target = $region3
  $region8: #{tpu_custom_call.1} parent=0 // loop_exit
    _

// kernel: tpu_custom_call.1
$region0: #{tpu_custom_call.1}
  #allocation0 [shape = 'u32[]', space=smem, size = 0x4, offset = 0x4, fixed_abs, tag = 'smem constant byte address 0x4 - core index']
  #allocation1 [shape = 'u32[144,128]{1,0:T(1,128)}', space=vmem, size = 0x12000, scoped, tag = 'internal scratch']
  %s0 = inlined_call_operand.vmem [shape: f32[16,16], index: 0, kind: input, shape index: {}]
  %s1 = inlined_call_operand.vmem [shape: f32[16,8], index: 1, kind: input, shape index: {}]
  %s2 = inlined_call_operand.vmem [shape: bf16[16,64], index: 2, kind: input, shape index: {}]
  %s3 = inlined_call_operand.vmem [shape: bf16[8,64], index: 3, kind: input, shape index: {}]
  %s4 = inlined_call_operand.vmem [shape: f32[1,64], index: 4, kind: input, shape index: {}]
  %s5 = inlined_call_operand.vmem [shape: bf16[64,64], index: 5, kind: input, shape index: {}]
  %s6 = inlined_call_operand.vmem [shape: f32[1,64], index: 6, kind: input, shape index: {}]
  %s7 = inlined_call_operand.vmem [shape: bf16[64,2], index: 7, kind: input, shape index: {}]
  %s8 = inlined_call_operand.vmem [shape: f32[1,2], index: 8, kind: input, shape index: {}]
  %s9 = inlined_call_operand.vmem [shape: f32[16,2], index: 9, kind: output, shape index: {}]
  %s10 = sld [smem:[#allocation0]]
  $region69: #{tpu_custom_call.1} parent=0
    _
  %s12 = ssub.s32 1, %s10
  %s13 = scalar_select 0, %s12, %s10
  loop: start=0, step=1, limit=4
  $region2: #{tpu_custom_call.1} parent=0 // loop_pre_header
    _
  $region3: #{tpu_custom_call.1} parent=0 // loop_header
    %s15 = sphi 0, %s19
    %p16 = scmp.ge.s32.totalorder %s15, 4
    %s25 = sphi 0, %s27
    %s28 = sphi 0, %s25
    %s29 = sphi 0, %s28
    %s45 = sphi 0, %s29
    %s51 = sphi 0, %s53
    %s54 = sphi 0, %s51
    %s55 = sphi 0, %s54
    %s71 = sphi 0, %s55
    %s75 = sphi 0, %s75
    %s77 = sphi 0, %s75
    %s78 = sphi 0, %s77
    %s92 = sphi 0, %s78
    %s96 = sphi 0, %s96
    %s98 = sphi 0, %s96
    %s99 = sphi 0, %s98
    %s113 = sphi 0, %s99
    %s117 = sphi 0, %s117
    %s119 = sphi 0, %s117
    %s120 = sphi 0, %s119
    %s134 = sphi 0, %s120
    %s138 = sphi 0, %s138
    %s140 = sphi 0, %s138
    %s141 = sphi 0, %s140
    %s155 = sphi 0, %s141
    %s159 = sphi 0, %s159
    %s161 = sphi 0, %s159
    %s162 = sphi 0, %s161
    %s176 = sphi 0, %s162
    %s180 = sphi 0, %s180
    %s182 = sphi 0, %s180
    %s183 = sphi 0, %s182
    %s197 = sphi 0, %s183
    %s201 = sphi 0, %s201
    %s203 = sphi 0, %s201
    %s204 = sphi 0, %s203
    %s218 = sphi 0, %s204
    %s224 = sphi 0, %s226
    %s227 = sphi 0, %s224
    %s228 = sphi 0, %s227
    %s244 = sphi 0, %s228
  $region4: #{tpu_custom_call.1} parent=0 // loop_header_branch
    %18 = sbr.rel (%p16) target = $region8
  $region5: #{tpu_custom_call.1} parent=0 // loop_body
    %s20 = ssub.s32 %s15, 1
    %s21 = ssub.s32 %s15, 2
    %s22 = sadd.s32 %s15, 1
    %s23 = ssub.s32 %s15, %s22
    %p24 = scmp.eq.s32.totalorder %s23, 0
    %s26 = sadd.s32 %s25, 1
    %s27 = scalar_select %p24, %s25, %s26
    %p30 = pneg %p24
    %p31 = scmp.eq.s32.totalorder %s15, 1
    %p32 = por %p30, %p31
    %p33 = scmp.ne.s32.totalorder %s25, %s28
    %p34 = scmp.eq.s32.totalorder %s15, 0
    %p35 = por %p33, %p34
    %p36 = scmp.ne.s32.totalorder %s25, %s28
    %p37 = scmp.eq.s32.totalorder %s20, 1
    %p38 = por %p36, %p37
    %p39 = scmp.ne.s32.totalorder %s28, %s29
    %p40 = scmp.eq.s32.totalorder %s20, 0
    %p41 = por %p39, %p40
    %p42 = scmp.ne.s32.totalorder %s28, %s29
    %p43 = scmp.eq.s32.totalorder %s21, 1
    %p44 = por %p42, %p43
    %p46 = scmp.ne.s32.totalorder %s29, %s45
    %p47 = scmp.eq.s32.totalorder %s21, 0
    %p48 = por %p46, %p47
    %s49 = ssub.s32 %s15, %s22
    %p50 = scmp.eq.s32.totalorder %s49, 0
    %s52 = sadd.s32 %s51, 1
    %s53 = scalar_select %p50, %s51, %s52
    %p56 = pneg %p50
    %p57 = scmp.eq.s32.totalorder %s15, 1
    %p58 = por %p56, %p57
    %p59 = scmp.ne.s32.totalorder %s51, %s54
    %p60 = scmp.eq.s32.totalorder %s15, 0
    %p61 = por %p59, %p60
    %p62 = scmp.ne.s32.totalorder %s51, %s54
    %p63 = scmp.eq.s32.totalorder %s20, 1
    %p64 = por %p62, %p63
    %p65 = scmp.ne.s32.totalorder %s54, %s55
    %p66 = scmp.eq.s32.totalorder %s20, 0
    %p67 = por %p65, %p66
    %p68 = scmp.ne.s32.totalorder %s54, %s55
    %p69 = scmp.eq.s32.totalorder %s21, 1
    %p70 = por %p68, %p69
    %p72 = scmp.ne.s32.totalorder %s55, %s71
    %p73 = scmp.eq.s32.totalorder %s21, 0
    %p74 = por %p72, %p73
    %s76 = sadd.s32 %s75, 1
    %p79 = scmp.eq.s32.totalorder %s15, 1
    %p80 = scmp.ne.s32.totalorder %s75, %s77
    %p81 = scmp.eq.s32.totalorder %s15, 0
    %p82 = por %p80, %p81
    %p83 = scmp.ne.s32.totalorder %s75, %s77
    %p84 = scmp.eq.s32.totalorder %s20, 1
    %p85 = por %p83, %p84
    %p86 = scmp.ne.s32.totalorder %s77, %s78
    %p87 = scmp.eq.s32.totalorder %s20, 0
    %p88 = por %p86, %p87
    %p89 = scmp.ne.s32.totalorder %s77, %s78
    %p90 = scmp.eq.s32.totalorder %s21, 1
    %p91 = por %p89, %p90
    %p93 = scmp.ne.s32.totalorder %s78, %s92
    %p94 = scmp.eq.s32.totalorder %s21, 0
    %p95 = por %p93, %p94
    %s97 = sadd.s32 %s96, 1
    %p100 = scmp.eq.s32.totalorder %s15, 1
    %p101 = scmp.ne.s32.totalorder %s96, %s98
    %p102 = scmp.eq.s32.totalorder %s15, 0
    %p103 = por %p101, %p102
    %p104 = scmp.ne.s32.totalorder %s96, %s98
    %p105 = scmp.eq.s32.totalorder %s20, 1
    %p106 = por %p104, %p105
    %p107 = scmp.ne.s32.totalorder %s98, %s99
    %p108 = scmp.eq.s32.totalorder %s20, 0
    %p109 = por %p107, %p108
    %p110 = scmp.ne.s32.totalorder %s98, %s99
    %p111 = scmp.eq.s32.totalorder %s21, 1
    %p112 = por %p110, %p111
    %p114 = scmp.ne.s32.totalorder %s99, %s113
    %p115 = scmp.eq.s32.totalorder %s21, 0
    %p116 = por %p114, %p115
    %s118 = sadd.s32 %s117, 1
    %p121 = scmp.eq.s32.totalorder %s15, 1
    %p122 = scmp.ne.s32.totalorder %s117, %s119
    %p123 = scmp.eq.s32.totalorder %s15, 0
    %p124 = por %p122, %p123
    %p125 = scmp.ne.s32.totalorder %s117, %s119
    %p126 = scmp.eq.s32.totalorder %s20, 1
    %p127 = por %p125, %p126
    %p128 = scmp.ne.s32.totalorder %s119, %s120
    %p129 = scmp.eq.s32.totalorder %s20, 0
    %p130 = por %p128, %p129
    %p131 = scmp.ne.s32.totalorder %s119, %s120
    %p132 = scmp.eq.s32.totalorder %s21, 1
    %p133 = por %p131, %p132
    %p135 = scmp.ne.s32.totalorder %s120, %s134
    %p136 = scmp.eq.s32.totalorder %s21, 0
    %p137 = por %p135, %p136
    %s139 = sadd.s32 %s138, 1
    %p142 = scmp.eq.s32.totalorder %s15, 1
    %p143 = scmp.ne.s32.totalorder %s138, %s140
    %p144 = scmp.eq.s32.totalorder %s15, 0
    %p145 = por %p143, %p144
    %p146 = scmp.ne.s32.totalorder %s138, %s140
    %p147 = scmp.eq.s32.totalorder %s20, 1
    %p148 = por %p146, %p147
    %p149 = scmp.ne.s32.totalorder %s140, %s141
    %p150 = scmp.eq.s32.totalorder %s20, 0
    %p151 = por %p149, %p150
    %p152 = scmp.ne.s32.totalorder %s140, %s141
    %p153 = scmp.eq.s32.totalorder %s21, 1
    %p154 = por %p152, %p153
    %p156 = scmp.ne.s32.totalorder %s141, %s155
    %p157 = scmp.eq.s32.totalorder %s21, 0
    %p158 = por %p156, %p157
    %s160 = sadd.s32 %s159, 1
    %p163 = scmp.eq.s32.totalorder %s15, 1
    %p164 = scmp.ne.s32.totalorder %s159, %s161
    %p165 = scmp.eq.s32.totalorder %s15, 0
    %p166 = por %p164, %p165
    %p167 = scmp.ne.s32.totalorder %s159, %s161
    %p168 = scmp.eq.s32.totalorder %s20, 1
    %p169 = por %p167, %p168
    %p170 = scmp.ne.s32.totalorder %s161, %s162
    %p171 = scmp.eq.s32.totalorder %s20, 0
    %p172 = por %p170, %p171
    %p173 = scmp.ne.s32.totalorder %s161, %s162
    %p174 = scmp.eq.s32.totalorder %s21, 1
    %p175 = por %p173, %p174
    %p177 = scmp.ne.s32.totalorder %s162, %s176
    %p178 = scmp.eq.s32.totalorder %s21, 0
    %p179 = por %p177, %p178
    %s181 = sadd.s32 %s180, 1
    %p184 = scmp.eq.s32.totalorder %s15, 1
    %p185 = scmp.ne.s32.totalorder %s180, %s182
    %p186 = scmp.eq.s32.totalorder %s15, 0
    %p187 = por %p185, %p186
    %p188 = scmp.ne.s32.totalorder %s180, %s182
    %p189 = scmp.eq.s32.totalorder %s20, 1
    %p190 = por %p188, %p189
    %p191 = scmp.ne.s32.totalorder %s182, %s183
    %p192 = scmp.eq.s32.totalorder %s20, 0
    %p193 = por %p191, %p192
    %p194 = scmp.ne.s32.totalorder %s182, %s183
    %p195 = scmp.eq.s32.totalorder %s21, 1
    %p196 = por %p194, %p195
    %p198 = scmp.ne.s32.totalorder %s183, %s197
    %p199 = scmp.eq.s32.totalorder %s21, 0
    %p200 = por %p198, %p199
    %s202 = sadd.s32 %s201, 1
    %p205 = scmp.eq.s32.totalorder %s15, 1
    %p206 = scmp.ne.s32.totalorder %s201, %s203
    %p207 = scmp.eq.s32.totalorder %s15, 0
    %p208 = por %p206, %p207
    %p209 = scmp.ne.s32.totalorder %s201, %s203
    %p210 = scmp.eq.s32.totalorder %s20, 1
    %p211 = por %p209, %p210
    %p212 = scmp.ne.s32.totalorder %s203, %s204
    %p213 = scmp.eq.s32.totalorder %s20, 0
    %p214 = por %p212, %p213
    %p215 = scmp.ne.s32.totalorder %s203, %s204
    %p216 = scmp.eq.s32.totalorder %s21, 1
    %p217 = por %p215, %p216
    %p219 = scmp.ne.s32.totalorder %s204, %s218
    %p220 = scmp.eq.s32.totalorder %s21, 0
    %p221 = por %p219, %p220
    %s222 = ssub.s32 %s15, %s22
    %p223 = scmp.eq.s32.totalorder %s222, 0
    %s225 = sadd.s32 %s224, 1
    %s226 = scalar_select %p223, %s224, %s225
    %p229 = pneg %p223
    %p230 = scmp.eq.s32.totalorder %s15, 1
    %p231 = por %p229, %p230
    %p232 = scmp.ne.s32.totalorder %s224, %s227
    %p233 = scmp.eq.s32.totalorder %s15, 0
    %p234 = por %p232, %p233
    %p235 = scmp.ne.s32.totalorder %s224, %s227
    %p236 = scmp.eq.s32.totalorder %s20, 1
    %p237 = por %p235, %p236
    %p238 = scmp.ne.s32.totalorder %s227, %s228
    %p239 = scmp.eq.s32.totalorder %s20, 0
    %p240 = por %p238, %p239
    %p241 = scmp.ne.s32.totalorder %s227, %s228
    %p242 = scmp.eq.s32.totalorder %s21, 1
    %p243 = por %p241, %p242
    %p245 = scmp.ne.s32.totalorder %s228, %s244
    %p246 = scmp.eq.s32.totalorder %s21, 0
    %p247 = por %p245, %p246
    %p248 = scmp.le.s32.totalorder 1, %s15
    %p249 = scmp.lt.s32.totalorder %s15, 3
    %p250 = pnand %p248, %p249
    %p251 = pneg %p250
    // Predicated region
    $region9: #{tpu_custom_call.1} parent=5 // pred_check
      _
    $region10: #{tpu_custom_call.1} parent=5 // pred_check_branch
      %253 = sbr.rel (%p250) target = $region12
    $region11: #{tpu_custom_call.1} parent=5 // pred_region
      %s254 = ssub.s32 %s15, 1
      // Predicated region
      $region13: #{tpu_custom_call.1} parent=11 // pred_check
        %p255 = pneg %p88
      $region14: #{tpu_custom_call.1} parent=11 // pred_check_branch
        %257 = sbr.rel (%p255) target = $region16
      $region15: #{tpu_custom_call.1} parent=11 // pred_region
        _
      $region16: #{tpu_custom_call.1} parent=11 // pred_fallthru
        _
      // Predicated region
      $region17: #{tpu_custom_call.1} parent=11 // pred_check
        %p258 = pneg %p109
      $region18: #{tpu_custom_call.1} parent=11 // pred_check_branch
        %260 = sbr.rel (%p258) target = $region20
      $region19: #{tpu_custom_call.1} parent=11 // pred_region
        _
      $region20: #{tpu_custom_call.1} parent=11 // pred_fallthru
        _
      // Predicated region
      $region21: #{tpu_custom_call.1} parent=11 // pred_check
        %p261 = pneg %p130
      $region22: #{tpu_custom_call.1} parent=11 // pred_check_branch
        %263 = sbr.rel (%p261) target = $region24
      $region23: #{tpu_custom_call.1} parent=11 // pred_region
        _
      $region24: #{tpu_custom_call.1} parent=11 // pred_fallthru
        _
      // Predicated region
      $region25: #{tpu_custom_call.1} parent=11 // pred_check
        %p264 = pneg %p151
      $region26: #{tpu_custom_call.1} parent=11 // pred_check_branch
        %266 = sbr.rel (%p264) target = $region28
      $region27: #{tpu_custom_call.1} parent=11 // pred_region
        _
      $region28: #{tpu_custom_call.1} parent=11 // pred_fallthru
        _
      // Predicated region
      $region29: #{tpu_custom_call.1} parent=11 // pred_check
        %p267 = pneg %p172
      $region30: #{tpu_custom_call.1} parent=11 // pred_check_branch
        %269 = sbr.rel (%p267) target = $region32
      $region31: #{tpu_custom_call.1} parent=11 // pred_region
        _
      $region32: #{tpu_custom_call.1} parent=11 // pred_fallthru
        _
      // Predicated region
      $region33: #{tpu_custom_call.1} parent=11 // pred_check
        %p270 = pneg %p193
      $region34: #{tpu_custom_call.1} parent=11 // pred_check_branch
        %272 = sbr.rel (%p270) target = $region36
      $region35: #{tpu_custom_call.1} parent=11 // pred_region
        _
      $region36: #{tpu_custom_call.1} parent=11 // pred_fallthru
        _
      // Predicated region
      $region37: #{tpu_custom_call.1} parent=11 // pred_check
        %p273 = pneg %p214
      $region38: #{tpu_custom_call.1} parent=11 // pred_check_branch
        %275 = sbr.rel (%p273) target = $region40
      $region39: #{tpu_custom_call.1} parent=11 // pred_region
        _
      $region40: #{tpu_custom_call.1} parent=11 // pred_fallthru
        _
    $region12: #{tpu_custom_call.1} parent=5 // pred_fallthru
      _
    %p276 = scmp.lt.s32.totalorder %s15, 2
    // Predicated region
    $region41: #{tpu_custom_call.1} parent=5 // pred_check
      %p277 = pneg %p276
    $region42: #{tpu_custom_call.1} parent=5 // pred_check_branch
      %279 = sbr.rel (%p277) target = $region44
    $region43: #{tpu_custom_call.1} parent=5 // pred_region
      // Predicated region
      $region45: #{tpu_custom_call.1} parent=43 // pred_check
        %p280 = pneg %p35
      $region46: #{tpu_custom_call.1} parent=43 // pred_check_branch
        %282 = sbr.rel (%p280) target = $region48
      $region47: #{tpu_custom_call.1} parent=43 // pred_region
        %p283 = scmp.lt.s32.totalorder %s15, 1
        %s284 = scalar_select %p283, %s15, 1
        %s285 = smul.addr %s284, 8
        %s286 = scalar_lea.vmem %s0, %s285
      $region48: #{tpu_custom_call.1} parent=43 // pred_fallthru
        _
      // Predicated region
      $region49: #{tpu_custom_call.1} parent=43 // pred_check
        %p287 = pneg %p61
      $region50: #{tpu_custom_call.1} parent=43 // pred_check_branch
        %289 = sbr.rel (%p287) target = $region52
      $region51: #{tpu_custom_call.1} parent=43 // pred_region
        %p290 = scmp.lt.s32.totalorder %s15, 1
        %s291 = scalar_select %p290, %s15, 1
        %s292 = smul.addr %s291, 8
        %s293 = scalar_lea.vmem %s1, %s292
      $region52: #{tpu_custom_call.1} parent=43 // pred_fallthru
        _
    $region44: #{tpu_custom_call.1} parent=5 // pred_fallthru
      _
    %p294 = scmp.le.s32.totalorder 1, %s15
    %p295 = scmp.lt.s32.totalorder %s15, 3
    %p296 = pnand %p294, %p295
    %p297 = pneg %p296
    // Predicated region
    $region53: #{tpu_custom_call.1} parent=5 // pred_check
      _
    $region54: #{tpu_custom_call.1} parent=5 // pred_check_branch
      %299 = sbr.rel (%p296) target = $region56
    $region55: #{tpu_custom_call.1} parent=5 // pred_region
      %s300 = ssub.s32 %s15, 1
      %p301 = scmp.lt.s32.totalorder %s20, 1
      %s302 = scalar_select %p301, %s20, 1
      %s303 = smul.addr %s302, 8
      %s304 = scalar_lea.vmem %s0, %s303
      %p305 = pneg %p41
      %p306 = pneg %p38
      %p307 = scmp.lt.s32.totalorder %s20, 1
      %s308 = scalar_select %p307, %s20, 1
      %s309 = smul.addr %s308, 8
      %s310 = scalar_lea.vmem %s1, %s309
      %p311 = pneg %p67
      %p312 = pneg %p64
      %p313 = pneg %p88
      %p314 = pneg %p85
      %p315 = pneg %p109
      %p316 = pneg %p106
      %p317 = pneg %p130
      %p318 = pneg %p127
      %p319 = pneg %p151
      %p320 = pneg %p148
      %p321 = pneg %p172
      %p322 = pneg %p169
      %p323 = pneg %p193
      %p324 = pneg %p190
      %p325 = pneg %p214
      %p326 = pneg %p211
      %p327 = pneg %p240
      %p328 = pneg %p237
      %p329 = scmp.lt.s32.totalorder %s20, 1
      %s330 = scalar_select %p329, %s20, 1
      %s331 = smul.addr %s330, 8
      %s332 = scalar_lea.vmem %s9, %s331
      %p333 = scmp.lt.s32.totalorder %s20, 1
      %s334 = scalar_select %p333, %s20, 1
      %s335 = smul.addr %s334, 8
      %s336 = scalar_lea.vmem %s0, %s335
      %p337 = scmp.lt.s32.totalorder %s20, 1
      %s338 = scalar_select %p337, %s20, 1
      %s339 = smul.addr %s338, 8
      %s340 = scalar_lea.vmem %s1, %s339
      %p341 = scmp.lt.s32.totalorder %s20, 1
      %s342 = scalar_select %p341, %s20, 1
      %s343 = smul.addr %s342, 8
      %s344 = scalar_lea.vmem %s9, %s343
      %v346 = vld [vmem:[%s336] sm:$0xff]
      %v347 = vpack.c.bf16 %v346, %v346
      %v348 = vld [vmem:[%s2] sm:$0xf]
      %v349 = vld [vmem:[%s2 + $0x4] sm:$0xf]
      %v350 = vld [vmem:[%s340] sm:$0xff]
      %v351 = vpack.c.bf16 %v350, %v350
      %v352 = vld [vmem:[%s3] sm:$0xf]
      %vm353 = vcmask 64512
      %v355 = vsel %vm353, %v351, 0
      %vm357 = vcmask 1043456
      %v359 = vsel %vm357, %v352, 0
      %361 = vmatprep.subr.bf16.mxu0 0
      %362 = vmatpush1.bf16.msra.mxu0 %v359
      %363 = vmatprep.subr.bf16.mxu0 0
      %364 = vmatpush1.bf16.msra.mxu0 0
      %365 = vmatprep.subr.bf16.mxu0 0
      %366 = vmatpush1.bf16.msra.mxu0 0
      %367 = vmatprep.subr.bf16.mxu0 0
      %368 = vmatpush1.bf16.msra.mxu0 0
      %369 = vmatprep.subr.bf16.mxu0 0
      %370 = vmatpush1.bf16.msra.mxu0 0
      %371 = vmatprep.subr.bf16.mxu0 0
      %372 = vmatpush1.bf16.msra.mxu0 0
      %373 = vmatprep.subr.bf16.mxu0 0
      %374 = vmatpush1.bf16.msra.mxu0 0
      %375 = vmatprep.subr.bf16.mxu0 0
      %376 = vmatpush1.bf16.msra.mxu0 0
      %377 = vmatprep.subr.bf16.mxu0 0
      %378 = vmatpush1.bf16.msra.mxu0 0
      %379 = vmatprep.subr.bf16.mxu0 0
      %380 = vmatpush1.bf16.msra.mxu0 0
      %381 = vmatprep.subr.bf16.mxu0 0
      %382 = vmatpush1.bf16.msra.mxu0 0
      %383 = vmatprep.subr.bf16.mxu0 0
      %384 = vmatpush1.bf16.msra.mxu0 0
      %385 = vmatprep.subr.bf16.mxu0 0
      %386 = vmatpush1.bf16.msra.mxu0 0
      %387 = vmatprep.subr.bf16.mxu0 0
      %388 = vmatpush1.bf16.msra.mxu0 0
      %389 = vmatprep.subr.bf16.mxu0 0
      %390 = vmatpush1.bf16.msra.mxu0 0
      %391 = vmatprep.subr.bf16.mxu0 0
      %392 = vmatpush1.bf16.msra.mxu0 0
      %393 = vmatprep.mubr.bf16.mxu0 0
      %394 = vmatmul.mubr.bf16.gmra.mrb[0].mxu0 %v355
      %v395 = vpop.f32.mrb[0].mxu0
      %v396 = vadd.f32 0.0, %v395
      %v397 = vpop.f32.mrb[0].mxu0
      %v398 = vpop.f32.mrb[0].mxu0
      %v399 = vpop.f32.mrb[0].mxu0
      %400 = vdwg.mxu0
      %v403 = vunpack.c.l.b16 %v348
      %v404 = vunpack.c.l.b16 %v349
      %v405 = vpack.c.b16 %v404, %v403
      %vm407 = vcmask 130048
      %v409 = vsel %vm407, %v347, 0
      %411 = vmatprep.subr.bf16.mxu0 0
      %412 = vmatpush1.bf16.msra.mxu0 %v405
      %413 = vmatprep.subr.bf16.mxu0 0
      %414 = vmatpush1.bf16.msra.mxu0 0
      %415 = vmatprep.subr.bf16.mxu0 0
      %416 = vmatpush1.bf16.msra.mxu0 0
      %417 = vmatprep.subr.bf16.mxu0 0
      %418 = vmatpush1.bf16.msra.mxu0 0
      %419 = vmatprep.subr.bf16.mxu0 0
      %420 = vmatpush1.bf16.msra.mxu0 0
      %421 = vmatprep.subr.bf16.mxu0 0
      %422 = vmatpush1.bf16.msra.mxu0 0
      %423 = vmatprep.subr.bf16.mxu0 0
      %424 = vmatpush1.bf16.msra.mxu0 0
      %425 = vmatprep.subr.bf16.mxu0 0
      %426 = vmatpush1.bf16.msra.mxu0 0
      %427 = vmatprep.subr.bf16.mxu0 0
      %428 = vmatpush1.bf16.msra.mxu0 0
      %429 = vmatprep.subr.bf16.mxu0 0
      %430 = vmatpush1.bf16.msra.mxu0 0
      %431 = vmatprep.subr.bf16.mxu0 0
      %432 = vmatpush1.bf16.msra.mxu0 0
      %433 = vmatprep.subr.bf16.mxu0 0
      %434 = vmatpush1.bf16.msra.mxu0 0
      %435 = vmatprep.subr.bf16.mxu0 0
      %436 = vmatpush1.bf16.msra.mxu0 0
      %437 = vmatprep.subr.bf16.mxu0 0
      %438 = vmatpush1.bf16.msra.mxu0 0
      %439 = vmatprep.subr.bf16.mxu0 0
      %440 = vmatpush1.bf16.msra.mxu0 0
      %441 = vmatprep.subr.bf16.mxu0 0
      %442 = vmatpush1.bf16.msra.mxu0 0
      %443 = vmatprep.mubr.bf16.mxu0 0
      %444 = vmatmul.mubr.bf16.gmra.mrb[0].mxu0 %v409
      %v445 = vpop.f32.mrb[0].mxu0
      %v446 = vadd.f32 %v396, %v445
      %v447 = vpop.f32.mrb[0].mxu0
      %v448 = vpop.f32.mrb[0].mxu0
      %v449 = vpop.f32.mrb[0].mxu0
      %450 = vdwg.mxu0
      %v451 = vld [vmem:[%s4] sm:$0x1]
      %v453 = vlaneseq
      %v454 = vshrl.u32 %v453, 7
      %v455 = vsub.s32 0, %v454
      %v456 = vrot.slane %v451, %v455
      %v458 = vadd.f32 %v446, %v456
      %v459 = vmax.f32 %v458, 0.0
      %v460 = vld [vmem:[%s5] sm:$0xf]
      %v461 = vld [vmem:[%s5 + $0x4] sm:$0xf]
      %v462 = vld [vmem:[%s5 + $0x8] sm:$0xf]
      %v463 = vld [vmem:[%s5 + $0xc] sm:$0xf]
      %v464 = vld [vmem:[%s5 + $0x10] sm:$0xf]
      %v465 = vld [vmem:[%s5 + $0x14] sm:$0xf]
      %v466 = vld [vmem:[%s5 + $0x18] sm:$0xf]
      %v467 = vld [vmem:[%s5 + $0x1c] sm:$0xf]
      %v468 = vld [vmem:[%s6] sm:$0x1]
      %v469 = vpack.c.bf16 %v459, %v459
      %v471 = vlaneseq
      %v472 = vshrl.u32 %v471, 7
      %v473 = vsub.s32 0, %v472
      %v474 = vrot.slane %v468, %v473
      %v484 = vunpack.c.l.b16 %v460
      %v485 = vunpack.c.l.b16 %v461
      %v486 = vunpack.c.l.b16 %v462
      %v487 = vunpack.c.l.b16 %v463
      %v488 = vunpack.c.l.b16 %v464
      %v489 = vunpack.c.l.b16 %v465
      %v490 = vunpack.c.l.b16 %v466
      %v491 = vunpack.c.l.b16 %v467
      %v492 = vpack.c.b16 %v485, %v484
      %v493 = vpack.c.b16 %v487, %v486
      %v494 = vpack.c.b16 %v489, %v488
      %v495 = vpack.c.b16 %v491, %v490
      %vm500 = vcmask 523264
      %v502 = vsel %vm500, %v469, 0
      %504 = vmatprep.subr.bf16.mxu0 0
      %505 = vmatpush1.bf16.msra.mxu0 %v492
      %506 = vmatprep.subr.bf16.mxu0 0
      %507 = vmatpush1.bf16.msra.mxu0 %v493
      %508 = vmatprep.subr.bf16.mxu0 0
      %509 = vmatpush1.bf16.msra.mxu0 %v494
      %510 = vmatprep.subr.bf16.mxu0 0
      %511 = vmatpush1.bf16.msra.mxu0 %v495
      %512 = vmatprep.subr.bf16.mxu0 0
      %513 = vmatpush1.bf16.msra.mxu0 0
      %514 = vmatprep.subr.bf16.mxu0 0
      %515 = vmatpush1.bf16.msra.mxu0 0
      %516 = vmatprep.subr.bf16.mxu0 0
      %517 = vmatpush1.bf16.msra.mxu0 0
      %518 = vmatprep.subr.bf16.mxu0 0
      %519 = vmatpush1.bf16.msra.mxu0 0
      %520 = vmatprep.subr.bf16.mxu0 0
      %521 = vmatpush1.bf16.msra.mxu0 0
      %522 = vmatprep.subr.bf16.mxu0 0
      %523 = vmatpush1.bf16.msra.mxu0 0
      %524 = vmatprep.subr.bf16.mxu0 0
      %525 = vmatpush1.bf16.msra.mxu0 0
      %526 = vmatprep.subr.bf16.mxu0 0
      %527 = vmatpush1.bf16.msra.mxu0 0
      %528 = vmatprep.subr.bf16.mxu0 0
      %529 = vmatpush1.bf16.msra.mxu0 0
      %530 = vmatprep.subr.bf16.mxu0 0
      %531 = vmatpush1.bf16.msra.mxu0 0
      %532 = vmatprep.subr.bf16.mxu0 0
      %533 = vmatpush1.bf16.msra.mxu0 0
      %534 = vmatprep.subr.bf16.mxu0 0
      %535 = vmatpush1.bf16.msra.mxu0 0
      %536 = vmatprep.mubr.bf16.mxu0 0
      %537 = vmatmul.mubr.bf16.gmra.mrb[0].mxu0 %v502
      %v538 = vpop.f32.mrb[0].mxu0
      %v539 = vadd.f32 %v474, %v538
      %v540 = vpop.f32.mrb[0].mxu0
      %v541 = vpop.f32.mrb[0].mxu0
      %v542 = vpop.f32.mrb[0].mxu0
      %543 = vdwg.mxu0
      %v544 = vmax.f32 %v539, 0.0
      %v545 = vld [vmem:[%s7] sm:$0xf]
      %v546 = vld [vmem:[%s7 + $0x4] sm:$0xf]
      %v547 = vld [vmem:[%s7 + $0x8] sm:$0xf]
      %v548 = vld [vmem:[%s7 + $0xc] sm:$0xf]
      %v549 = vld [vmem:[%s7 + $0x10] sm:$0xf]
      %v550 = vld [vmem:[%s7 + $0x14] sm:$0xf]
      %v551 = vld [vmem:[%s7 + $0x18] sm:$0xf]
      %v552 = vld [vmem:[%s7 + $0x1c] sm:$0xf]
      %v553 = vld [vmem:[%s8] sm:$0x1]
      %v554 = vpack.c.bf16 %v544, %v544
      %v556 = vlaneseq
      %v557 = vshrl.u32 %v556, 7
      %v558 = vsub.s32 0, %v557
      %v559 = vrot.slane %v553, %v558
      %v569 = vunpack.c.l.b16 %v545
      %v570 = vunpack.c.l.b16 %v546
      %v571 = vunpack.c.l.b16 %v547
      %v572 = vunpack.c.l.b16 %v548
      %v573 = vunpack.c.l.b16 %v549
      %v574 = vunpack.c.l.b16 %v550
      %v575 = vunpack.c.l.b16 %v551
      %v576 = vunpack.c.l.b16 %v552
      %v577 = vpack.c.b16 %v570, %v569
      %v578 = vpack.c.b16 %v572, %v571
      %v579 = vpack.c.b16 %v574, %v573
      %v580 = vpack.c.b16 %v576, %v575
      %v586 = vsel %vm500, %v554, 0
      %588 = vmatprep.subr.bf16.mxu0 0
      %589 = vmatpush1.bf16.msra.mxu0 %v577
      %590 = vmatprep.subr.bf16.mxu0 0
      %591 = vmatpush1.bf16.msra.mxu0 %v578
      %592 = vmatprep.subr.bf16.mxu0 0
      %593 = vmatpush1.bf16.msra.mxu0 %v579
      %594 = vmatprep.subr.bf16.mxu0 0
      %595 = vmatpush1.bf16.msra.mxu0 %v580
      %596 = vmatprep.subr.bf16.mxu0 0
      %597 = vmatpush1.bf16.msra.mxu0 0
      %598 = vmatprep.subr.bf16.mxu0 0
      %599 = vmatpush1.bf16.msra.mxu0 0
      %600 = vmatprep.subr.bf16.mxu0 0
      %601 = vmatpush1.bf16.msra.mxu0 0
      %602 = vmatprep.subr.bf16.mxu0 0
      %603 = vmatpush1.bf16.msra.mxu0 0
      %604 = vmatprep.subr.bf16.mxu0 0
      %605 = vmatpush1.bf16.msra.mxu0 0
      %606 = vmatprep.subr.bf16.mxu0 0
      %607 = vmatpush1.bf16.msra.mxu0 0
      %608 = vmatprep.subr.bf16.mxu0 0
      %609 = vmatpush1.bf16.msra.mxu0 0
      %610 = vmatprep.subr.bf16.mxu0 0
      %611 = vmatpush1.bf16.msra.mxu0 0
      %612 = vmatprep.subr.bf16.mxu0 0
      %613 = vmatpush1.bf16.msra.mxu0 0
      %614 = vmatprep.subr.bf16.mxu0 0
      %615 = vmatpush1.bf16.msra.mxu0 0
      %616 = vmatprep.subr.bf16.mxu0 0
      %617 = vmatpush1.bf16.msra.mxu0 0
      %618 = vmatprep.subr.bf16.mxu0 0
      %619 = vmatpush1.bf16.msra.mxu0 0
      %620 = vmatprep.mubr.bf16.mxu0 0
      %621 = vmatmul.mubr.bf16.gmra.mrb[0].mxu0 %v586
      %v622 = vpop.f32.mrb[0].mxu0
      %v623 = vadd.f32 %v559, %v622
      %v624 = vpop.f32.mrb[0].mxu0
      %v625 = vpop.f32.mrb[0].mxu0
      %v626 = vpop.f32.mrb[0].mxu0
      %627 = vdwg.mxu0
      %vm628 = vcmask 15360
      %629 = vst.msk [vmem:[%s344] sm:$0xff] %vm628, %v623
      %p630 = scmp.lt.s32.totalorder %s20, 1
      %s631 = scalar_select %p630, %s20, 1
      %s632 = smul.addr %s631, 8
      %s633 = scalar_lea.vmem %s9, %s632
      // Predicated region
      $region57: #{tpu_custom_call.1} parent=55 // pred_check
        %p634 = pneg %p237
      $region58: #{tpu_custom_call.1} parent=55 // pred_check_branch
        %636 = sbr.rel (%p634) target = $region60
      $region59: #{tpu_custom_call.1} parent=55 // pred_region
        _
      $region60: #{tpu_custom_call.1} parent=55 // pred_fallthru
        _
    $region56: #{tpu_custom_call.1} parent=5 // pred_fallthru
      _
    %p637 = scmp.le.s32.totalorder 2, %s15
    // Predicated region
    $region61: #{tpu_custom_call.1} parent=5 // pred_check
      %p638 = pneg %p637
    $region62: #{tpu_custom_call.1} parent=5 // pred_check_branch
      %640 = sbr.rel (%p638) target = $region64
    $region63: #{tpu_custom_call.1} parent=5 // pred_region
      %s641 = ssub.s32 %s15, 2
      // Predicated region
      $region65: #{tpu_custom_call.1} parent=63 // pred_check
        %p642 = pneg %p243
      $region66: #{tpu_custom_call.1} parent=63 // pred_check_branch
        %644 = sbr.rel (%p642) target = $region68
      $region67: #{tpu_custom_call.1} parent=63 // pred_region
        %p645 = scmp.lt.s32.totalorder %s21, 1
        %s646 = scalar_select %p645, %s21, 1
        %s647 = smul.addr %s646, 8
        %s648 = scalar_lea.vmem %s9, %s647
      $region68: #{tpu_custom_call.1} parent=63 // pred_fallthru
        _
    $region64: #{tpu_custom_call.1} parent=5 // pred_fallthru
      _
  $region6: #{tpu_custom_call.1} parent=0 // loop_footer
    %s19 = sadd.s32 1, %s15
  $region7: #{tpu_custom_call.1} parent=0 // loop_footer_branch
    %14 = sbr.rel target = $region3
  $region8: #{tpu_custom_call.1} parent=0 // loop_exit
    _

</llo_original>
